<compile_context>
chip_gen: v7x
topology: tpu7x:2x2x1
jax: 0.10.0
libtpu: 0.0.40
codegen_flags: <defaults>
</compile_context>

<pallas_src>
import functools

import jax
import jax.numpy as jnp
import numpy as np
from jax import lax
from jax.experimental import pallas as pl
from jax.experimental.pallas import tpu as pltpu

FEATURE_DIM = 17 * 2      # 34
HIDDEN = 128
K = 3


def _classifier_kernel(x_ref, w1_ref, b1_ref, w2_ref, b2_ref, w3_ref, b3_ref,
                       wl_ref, bl_ref, out_ref, *, block_b, seq_len):
    T = seq_len
    M = block_b * T
    inv_t = 1.0 / T

    # Per-row time index within its batch element (hoisted: reused by all 3 convs).
    t_idx = lax.broadcasted_iota(jnp.int32, (M, 1), 0) % T
    first_row = t_idx == 0          # rows whose x[t-1] tap is the zero pad
    last_row = t_idx == T - 1       # rows whose x[t+1] tap is the zero pad

    def conv_relu(h_bf16, w_ref, b_ref):
        # One wide matmul for all three taps: (M, Cin) @ (Cin, 3*HIDDEN) -> f32.
        y = jnp.dot(h_bf16, w_ref[...], preferred_element_type=jnp.float32)
        y0 = y[:, :HIDDEN]                 # tap applied to x[t-1]
        y1 = y[:, HIDDEN:2 * HIDDEN]       # tap applied to x[t]
        y2 = y[:, 2 * HIDDEN:]             # tap applied to x[t+1]
        # Shift the matmul OUTPUTS (roll = XLU op) instead of concatenating
        # shifted inputs; the mask zeroes wrapped rows (conv zero padding and
        # batch-element boundaries in the flattened slab).
        y0s = jnp.where(first_row, 0.0, pltpu.roll(y0, 1, axis=0))
        y2s = jnp.where(last_row, 0.0, pltpu.roll(y2, M - 1, axis=0))
        return jnp.maximum(y0s + y1 + y2s + b_ref[...], 0.0)

    x = x_ref[...].astype(jnp.bfloat16)                       # (M, 34)
    h = conv_relu(x, w1_ref, b1_ref)                          # (M, 128) f32
    h = conv_relu(h.astype(jnp.bfloat16), w2_ref, b2_ref)     # (M, 128) f32
    h = conv_relu(h.astype(jnp.bfloat16), w3_ref, b3_ref)     # (M, 128) f32

    # AdaptiveAvgPool1d(1): mean over time as sum * (1/T) (precomputed recip).
    pooled = jnp.sum(h.reshape(block_b, T, HIDDEN), axis=1) * inv_t  # (Bt, 128)

    # Dropout(0.5) is identity at inference.  Linear(128 -> 1) as a small MXU
    # dot producing a lane-dense (1, Bt) logits row.
    logits = lax.dot_general(wl_ref[...], pooled,
                             (((1,), (1,)), ((), ())),
                             preferred_element_type=jnp.float32) + bl_ref[...]
    out_ref[...] = logits                                      # (1, Bt)


def conv1d_classifier_forward(x, params, *, block_b=None):
    """x: (B, T, FEATURE_DIM) float32  ->  (B,) float32"""
    B, T, F = x.shape
    assert F == FEATURE_DIM

    # Batch tile: make the matmul M-dim (block_b * T) large (target ~1024 rows),
    # which is comfortably inside VMEM on v5e/v6e/v7x for these channel widths.
    if block_b is None:
        block_b = max(1, min(B, max(1, 1024 // T)))
    nt = pl.cdiv(B, block_b)
    Bp = nt * block_b
    if Bp != B:
        x = jnp.pad(x, ((0, Bp - B), (0, 0), (0, 0)))
    x2 = x.reshape(Bp * T, F)                                  # (M_total, 34), no lane padding

    # torch conv weight (Cout, Cin, K) -> wide kernel weight (Cin, K*Cout), bf16.
    w1_t, b1, w2_t, b2, w3_t, b3, wl_t, bl = params

    def wide(w_t):
        cout, cin, k = w_t.shape
        return jnp.transpose(w_t, (1, 2, 0)).reshape(cin, k * cout).astype(jnp.bfloat16)

    w1 = wide(w1_t)                                            # (34, 384) bf16
    w2 = wide(w2_t)                                            # (128, 384) bf16
    w3 = wide(w3_t)                                            # (128, 384) bf16
    b1_ = b1.reshape(1, HIDDEN).astype(jnp.float32)
    b2_ = b2.reshape(1, HIDDEN).astype(jnp.float32)
    b3_ = b3.reshape(1, HIDDEN).astype(jnp.float32)
    wl = wl_t.reshape(1, HIDDEN).astype(jnp.float32)
    bl_ = bl.reshape(1, 1).astype(jnp.float32)

    # Weight/bias blocks are grid-invariant (index_map returns (0, ...) for all
    # steps), so Pallas keeps them resident in VMEM across the whole grid.
    full = lambda shape: pl.BlockSpec(shape, lambda i: (0,) * len(shape))
    kernel = functools.partial(_classifier_kernel, block_b=block_b, seq_len=T)

    out = pl.pallas_call(
        kernel,
        out_shape=jax.ShapeDtypeStruct((nt, block_b), jnp.float32),
        grid_spec=pltpu.PrefetchScalarGridSpec(
            num_scalar_prefetch=0,
            grid=(nt,),
            in_specs=[
                pl.BlockSpec((block_b * T, F), lambda i: (i, 0)),   # streamed input
                full((F, K * HIDDEN)),
                full((1, HIDDEN)),
                full((HIDDEN, K * HIDDEN)),
                full((1, HIDDEN)),
                full((HIDDEN, K * HIDDEN)),
                full((1, HIDDEN)),
                full((1, HIDDEN)),
                full((1, 1)),
            ],
            out_specs=pl.BlockSpec((1, block_b), lambda i: (i, 0)),  # lane-dense logits
        ),
        compiler_params=pltpu.CompilerParams(
            dimension_semantics=("parallel",)),
    )(x2, w1, b1_, w2, b2_, w3, b3_, wl, bl_)

    return out.reshape(-1)[:B]


def ref_forward(x, params):
    """Pure-JAX f32 reference mirroring the PyTorch module (eval mode)."""
    w1, b1, w2, b2, w3, b3, wl, bl = params
    h = jnp.transpose(x, (0, 2, 1))                            # (B, F, T)

    def conv(h, w, b):
        y = lax.conv_general_dilated(
            h, w, window_strides=(1,), padding=[(1, 1)],
            dimension_numbers=("NCH", "OIH", "NCH"))
        return jnp.maximum(y + b[None, :, None], 0.0)

    h = conv(h, w1, b1)
    h = conv(h, w2, b2)
    h = conv(h, w3, b3)
    pooled = jnp.mean(h, axis=-1)                              # (B, 128)
    return (pooled @ wl.T + bl).reshape(-1)                    # (B,)


def init_params(key):
    ks = jax.random.split(key, 8)
    scale = 0.1
    w1 = scale * jax.random.normal(ks[0], (HIDDEN, FEATURE_DIM, K), jnp.float32)
    b1 = scale * jax.random.normal(ks[1], (HIDDEN,), jnp.float32)
    w2 = scale * jax.random.normal(ks[2], (HIDDEN, HIDDEN, K), jnp.float32)
    b2 = scale * jax.random.normal(ks[3], (HIDDEN,), jnp.float32)
    w3 = scale * jax.random.normal(ks[4], (HIDDEN, HIDDEN, K), jnp.float32)
    b3 = scale * jax.random.normal(ks[5], (HIDDEN,), jnp.float32)
    wl = scale * jax.random.normal(ks[6], (1, HIDDEN), jnp.float32)
    bl = scale * jax.random.normal(ks[7], (1,), jnp.float32)
    return (w1, b1, w2, b2, w3, b3, wl, bl)


if __name__ == "__main__":
    key = jax.random.PRNGKey(0)
    kx, kp = jax.random.split(key)
    params = init_params(kp)

    # Config 1: single batch tile (all of B in one grid step).
    B, T = 8, 16
    x = jax.random.normal(kx, (B, T, FEATURE_DIM), jnp.float32)
    out = jax.block_until_ready(jax.jit(conv1d_classifier_forward)(x, params))
    ref = ref_forward(x, params)
    np.testing.assert_allclose(np.asarray(out), np.asarray(ref), rtol=3e-2, atol=3e-2)
    assert out.shape == (B,)

    # Config 2: multiple grid steps + batch padding (B not a multiple of block_b).
    B2 = 5
    x2 = jax.random.normal(jax.random.PRNGKey(1), (B2, T, FEATURE_DIM), jnp.float32)
    fwd2 = jax.jit(functools.partial(conv1d_classifier_forward, block_b=2))
    out2 = jax.block_until_ready(fwd2(x2, params))
    ref2 = ref_forward(x2, params)
    np.testing.assert_allclose(np.asarray(out2), np.asarray(ref2), rtol=3e-2, atol=3e-2)
    assert out2.shape == (B2,)

    print("KERNEL_OK")
</pallas_src>

<mosaic_0001>
module attributes {stable_mosaic.version = 11 : i64} {
  func.func @_classifier_kernel(%arg0: i32, %arg1: memref<128x34xf32, #tpu.memory_space<vmem>>, %arg2: memref<34x384xbf16, #tpu.memory_space<vmem>>, %arg3: memref<1x128xf32, #tpu.memory_space<vmem>>, %arg4: memref<128x384xbf16, #tpu.memory_space<vmem>>, %arg5: memref<1x128xf32, #tpu.memory_space<vmem>>, %arg6: memref<128x384xbf16, #tpu.memory_space<vmem>>, %arg7: memref<1x128xf32, #tpu.memory_space<vmem>>, %arg8: memref<1x128xf32, #tpu.memory_space<vmem>>, %arg9: memref<1x1xf32, #tpu.memory_space<vmem>>, %arg10: memref<1x8xf32, #tpu.memory_space<vmem>>) attributes {dimension_semantics = [#tpu.dimension_semantics<parallel>], iteration_bounds = array<i64: 1>, scalar_prefetch = 0 : i64, scratch_operands = 0 : i64, tpu.core_type = #tpu.core_type<tc>, window_params = [{transform_indices = @transform_0, window_bounds = array<i64: 128, 34>}, {pipeline_mode = #tpu.pipeline_mode<synchronous>, transform_indices = @transform_1, window_bounds = array<i64: 34, 384>}, {pipeline_mode = #tpu.pipeline_mode<synchronous>, transform_indices = @transform_2, window_bounds = array<i64: 1, 128>}, {pipeline_mode = #tpu.pipeline_mode<synchronous>, transform_indices = @transform_3, window_bounds = array<i64: 128, 384>}, {pipeline_mode = #tpu.pipeline_mode<synchronous>, transform_indices = @transform_4, window_bounds = array<i64: 1, 128>}, {pipeline_mode = #tpu.pipeline_mode<synchronous>, transform_indices = @transform_5, window_bounds = array<i64: 128, 384>}, {pipeline_mode = #tpu.pipeline_mode<synchronous>, transform_indices = @transform_6, window_bounds = array<i64: 1, 128>}, {pipeline_mode = #tpu.pipeline_mode<synchronous>, transform_indices = @transform_7, window_bounds = array<i64: 1, 128>}, {pipeline_mode = #tpu.pipeline_mode<synchronous>, transform_indices = @transform_8, window_bounds = array<i64: 1, 1>}, {transform_indices = @transform_9, window_bounds = array<i64: 1, 8>}]} {
    %0 = tpu.iota {dimensions = array<i32: 0>} : vector<128x1xi32>
    %c16_i32 = arith.constant 16 : i32
    %c0_i32 = arith.constant 0 : i32
    %1 = arith.cmpi eq, %c16_i32, %c0_i32 : i32
    %c1_i32 = arith.constant 1 : i32
    %2 = arith.select %1, %c1_i32, %c16_i32 : i32
    %3 = vector.broadcast %2 : i32 to vector<128x1xi32>
    %4 = arith.remsi %0, %3 : vector<128x1xi32>
    %c0_i32_0 = arith.constant 0 : i32
    %5 = vector.broadcast %c0_i32_0 : i32 to vector<128x1xi32>
    %6 = arith.cmpi ne, %4, %5 : vector<128x1xi32>
    %c0_i32_1 = arith.constant 0 : i32
    %7 = vector.broadcast %c0_i32_1 : i32 to vector<128x1xi32>
    %8 = arith.cmpi slt, %4, %7 : vector<128x1xi32>
    %c0_i32_2 = arith.constant 0 : i32
    %9 = arith.cmpi slt, %2, %c0_i32_2 : i32
    %10 = vector.broadcast %9 : i1 to vector<128x1xi1>
    %11 = vector.broadcast %10 : vector<128x1xi1> to vector<128x1xi1>
    %12 = arith.xori %8, %11 : vector<128x1xi1>
    %13 = arith.andi %12, %6 : vector<128x1xi1>
    %14 = vector.broadcast %2 : i32 to vector<128x1xi32>
    %15 = arith.addi %4, %14 : vector<128x1xi32>
    %16 = arith.select %13, %15, %4 : vector<128x1xi1>, vector<128x1xi32>
    %c0_i32_3 = arith.constant 0 : i32
    %17 = vector.broadcast %c0_i32_3 : i32 to vector<128x1xi32>
    %18 = arith.cmpi eq, %16, %17 : vector<128x1xi32>
    %c15_i32 = arith.constant 15 : i32
    %19 = vector.broadcast %c15_i32 : i32 to vector<128x1xi32>
    %20 = arith.cmpi eq, %16, %19 : vector<128x1xi32>
    %c0 = arith.constant 0 : index
    %c0_4 = arith.constant 0 : index
    %21 = vector.load %arg1[%c0, %c0_4] : memref<128x34xf32, #tpu.memory_space<vmem>>, vector<128x34xf32>
    %22 = arith.truncf %21 : vector<128x34xf32> to vector<128x34xbf16>
    %c0_5 = arith.constant 0 : index
    %c0_6 = arith.constant 0 : index
    %23 = vector.load %arg2[%c0_5, %c0_6] : memref<34x384xbf16, #tpu.memory_space<vmem>>, vector<34x384xbf16>
    %cst = arith.constant dense<0.000000e+00> : vector<128x384xf32>
    %24 = tpu.matmul %22, %23, %cst {dimension_numbers = #tpu.dot_dimension_numbers<[1], [0], [0], [1], [0, 0, 1, 1], [], []>} : vector<128x34xbf16>, vector<34x384xbf16>, vector<128x384xf32> -> vector<128x384xf32>
    %25 = vector.extract_strided_slice %24 {offsets = [0, 0], sizes = [128, 128], strides = [1, 1]} : vector<128x384xf32> to vector<128x128xf32>
    %26 = vector.extract_strided_slice %24 {offsets = [0, 128], sizes = [128, 128], strides = [1, 1]} : vector<128x384xf32> to vector<128x128xf32>
    %27 = vector.extract_strided_slice %24 {offsets = [0, 256], sizes = [128, 128], strides = [1, 1]} : vector<128x384xf32> to vector<128x128xf32>
    %c1_i32_7 = arith.constant 1 : i32
    %28 = tpu.dynamic_rotate %25 by %c1_i32_7 dim 0 : vector<128x128xf32>, i32 -> vector<128x128xf32>
    %cst_8 = arith.constant 0.000000e+00 : f32
    %29 = vector.shape_cast %18 : vector<128x1xi1> to vector<128x1xi1>
    %30 = vector.broadcast %29 : vector<128x1xi1> to vector<128x128xi1>
    %31 = vector.broadcast %cst_8 : f32 to vector<128x128xf32>
    %32 = arith.select %30, %31, %28 : vector<128x128xi1>, vector<128x128xf32>
    %c127_i32 = arith.constant 127 : i32
    %33 = tpu.dynamic_rotate %27 by %c127_i32 dim 0 : vector<128x128xf32>, i32 -> vector<128x128xf32>
    %cst_9 = arith.constant 0.000000e+00 : f32
    %34 = vector.shape_cast %20 : vector<128x1xi1> to vector<128x1xi1>
    %35 = vector.broadcast %34 : vector<128x1xi1> to vector<128x128xi1>
    %36 = vector.broadcast %cst_9 : f32 to vector<128x128xf32>
    %37 = arith.select %35, %36, %33 : vector<128x128xi1>, vector<128x128xf32>
    %38 = arith.addf %32, %26 : vector<128x128xf32>
    %39 = arith.addf %38, %37 : vector<128x128xf32>
    %c0_10 = arith.constant 0 : index
    %c0_11 = arith.constant 0 : index
    %40 = vector.load %arg3[%c0_10, %c0_11] : memref<1x128xf32, #tpu.memory_space<vmem>>, vector<1x128xf32>
    %41 = vector.broadcast %40 : vector<1x128xf32> to vector<128x128xf32>
    %42 = arith.addf %39, %41 : vector<128x128xf32>
    %cst_12 = arith.constant 0.000000e+00 : f32
    %43 = vector.broadcast %cst_12 : f32 to vector<128x128xf32>
    %44 = arith.maximumf %42, %43 : vector<128x128xf32>
    %45 = arith.truncf %44 : vector<128x128xf32> to vector<128x128xbf16>
    %c0_13 = arith.constant 0 : index
    %c0_14 = arith.constant 0 : index
    %46 = vector.load %arg4[%c0_13, %c0_14] : memref<128x384xbf16, #tpu.memory_space<vmem>>, vector<128x384xbf16>
    %cst_15 = arith.constant dense<0.000000e+00> : vector<128x384xf32>
    %47 = tpu.matmul %45, %46, %cst_15 {dimension_numbers = #tpu.dot_dimension_numbers<[1], [0], [0], [1], [0, 0, 1, 1], [], []>} : vector<128x128xbf16>, vector<128x384xbf16>, vector<128x384xf32> -> vector<128x384xf32>
    %48 = vector.extract_strided_slice %47 {offsets = [0, 0], sizes = [128, 128], strides = [1, 1]} : vector<128x384xf32> to vector<128x128xf32>
    %49 = vector.extract_strided_slice %47 {offsets = [0, 128], sizes = [128, 128], strides = [1, 1]} : vector<128x384xf32> to vector<128x128xf32>
    %50 = vector.extract_strided_slice %47 {offsets = [0, 256], sizes = [128, 128], strides = [1, 1]} : vector<128x384xf32> to vector<128x128xf32>
    %c1_i32_16 = arith.constant 1 : i32
    %51 = tpu.dynamic_rotate %48 by %c1_i32_16 dim 0 : vector<128x128xf32>, i32 -> vector<128x128xf32>
    %cst_17 = arith.constant 0.000000e+00 : f32
    %52 = vector.shape_cast %18 : vector<128x1xi1> to vector<128x1xi1>
    %53 = vector.broadcast %52 : vector<128x1xi1> to vector<128x128xi1>
    %54 = vector.broadcast %cst_17 : f32 to vector<128x128xf32>
    %55 = arith.select %53, %54, %51 : vector<128x128xi1>, vector<128x128xf32>
    %c127_i32_18 = arith.constant 127 : i32
    %56 = tpu.dynamic_rotate %50 by %c127_i32_18 dim 0 : vector<128x128xf32>, i32 -> vector<128x128xf32>
    %cst_19 = arith.constant 0.000000e+00 : f32
    %57 = vector.shape_cast %20 : vector<128x1xi1> to vector<128x1xi1>
    %58 = vector.broadcast %57 : vector<128x1xi1> to vector<128x128xi1>
    %59 = vector.broadcast %cst_19 : f32 to vector<128x128xf32>
    %60 = arith.select %58, %59, %56 : vector<128x128xi1>, vector<128x128xf32>
    %61 = arith.addf %55, %49 : vector<128x128xf32>
    %62 = arith.addf %61, %60 : vector<128x128xf32>
    %c0_20 = arith.constant 0 : index
    %c0_21 = arith.constant 0 : index
    %63 = vector.load %arg5[%c0_20, %c0_21] : memref<1x128xf32, #tpu.memory_space<vmem>>, vector<1x128xf32>
    %64 = vector.broadcast %63 : vector<1x128xf32> to vector<128x128xf32>
    %65 = arith.addf %62, %64 : vector<128x128xf32>
    %cst_22 = arith.constant 0.000000e+00 : f32
    %66 = vector.broadcast %cst_22 : f32 to vector<128x128xf32>
    %67 = arith.maximumf %65, %66 : vector<128x128xf32>
    %68 = arith.truncf %67 : vector<128x128xf32> to vector<128x128xbf16>
    %c0_23 = arith.constant 0 : index
    %c0_24 = arith.constant 0 : index
    %69 = vector.load %arg6[%c0_23, %c0_24] : memref<128x384xbf16, #tpu.memory_space<vmem>>, vector<128x384xbf16>
    %cst_25 = arith.constant dense<0.000000e+00> : vector<128x384xf32>
    %70 = tpu.matmul %68, %69, %cst_25 {dimension_numbers = #tpu.dot_dimension_numbers<[1], [0], [0], [1], [0, 0, 1, 1], [], []>} : vector<128x128xbf16>, vector<128x384xbf16>, vector<128x384xf32> -> vector<128x384xf32>
    %71 = vector.extract_strided_slice %70 {offsets = [0, 0], sizes = [128, 128], strides = [1, 1]} : vector<128x384xf32> to vector<128x128xf32>
    %72 = vector.extract_strided_slice %70 {offsets = [0, 128], sizes = [128, 128], strides = [1, 1]} : vector<128x384xf32> to vector<128x128xf32>
    %73 = vector.extract_strided_slice %70 {offsets = [0, 256], sizes = [128, 128], strides = [1, 1]} : vector<128x384xf32> to vector<128x128xf32>
    %c1_i32_26 = arith.constant 1 : i32
    %74 = tpu.dynamic_rotate %71 by %c1_i32_26 dim 0 : vector<128x128xf32>, i32 -> vector<128x128xf32>
    %cst_27 = arith.constant 0.000000e+00 : f32
    %75 = vector.shape_cast %18 : vector<128x1xi1> to vector<128x1xi1>
    %76 = vector.broadcast %75 : vector<128x1xi1> to vector<128x128xi1>
    %77 = vector.broadcast %cst_27 : f32 to vector<128x128xf32>
    %78 = arith.select %76, %77, %74 : vector<128x128xi1>, vector<128x128xf32>
    %c127_i32_28 = arith.constant 127 : i32
    %79 = tpu.dynamic_rotate %73 by %c127_i32_28 dim 0 : vector<128x128xf32>, i32 -> vector<128x128xf32>
    %cst_29 = arith.constant 0.000000e+00 : f32
    %80 = vector.shape_cast %20 : vector<128x1xi1> to vector<128x1xi1>
    %81 = vector.broadcast %80 : vector<128x1xi1> to vector<128x128xi1>
    %82 = vector.broadcast %cst_29 : f32 to vector<128x128xf32>
    %83 = arith.select %81, %82, %79 : vector<128x128xi1>, vector<128x128xf32>
    %84 = arith.addf %78, %72 : vector<128x128xf32>
    %85 = arith.addf %84, %83 : vector<128x128xf32>
    %c0_30 = arith.constant 0 : index
    %c0_31 = arith.constant 0 : index
    %86 = vector.load %arg7[%c0_30, %c0_31] : memref<1x128xf32, #tpu.memory_space<vmem>>, vector<1x128xf32>
    %87 = vector.broadcast %86 : vector<1x128xf32> to vector<128x128xf32>
    %88 = arith.addf %85, %87 : vector<128x128xf32>
    %cst_32 = arith.constant 0.000000e+00 : f32
    %89 = vector.broadcast %cst_32 : f32 to vector<128x128xf32>
    %90 = arith.maximumf %88, %89 : vector<128x128xf32>
    %91 = vector.shape_cast %90 : vector<128x128xf32> to vector<8x16x128xf32>
    %cst_33 = arith.constant dense<0.000000e+00> : vector<8x128xf32>
    %92 = vector.multi_reduction <add>, %91, %cst_33 [1] : vector<8x16x128xf32> to vector<8x128xf32>
    %cst_34 = arith.constant 6.250000e-02 : f32
    %93 = vector.broadcast %cst_34 : f32 to vector<8x128xf32>
    %94 = arith.mulf %92, %93 : vector<8x128xf32>
    %c0_35 = arith.constant 0 : index
    %c0_36 = arith.constant 0 : index
    %95 = vector.load %arg8[%c0_35, %c0_36] : memref<1x128xf32, #tpu.memory_space<vmem>>, vector<1x128xf32>
    %cst_37 = arith.constant dense<0.000000e+00> : vector<1x8xf32>
    %96 = tpu.matmul %95, %94, %cst_37 {dimension_numbers = #tpu.dot_dimension_numbers<[1], [1], [0], [0], [0, 0, 1, 0], [], []>} : vector<1x128xf32>, vector<8x128xf32>, vector<1x8xf32> -> vector<1x8xf32>
    %c0_38 = arith.constant 0 : index
    %c0_39 = arith.constant 0 : index
    %97 = vector.load %arg9[%c0_38, %c0_39] : memref<1x1xf32, #tpu.memory_space<vmem>>, vector<1x1xf32>
    %98 = vector.broadcast %97 : vector<1x1xf32> to vector<1x8xf32>
    %99 = arith.addf %96, %98 : vector<1x8xf32>
    %c0_40 = arith.constant 0 : index
    %c0_41 = arith.constant 0 : index
    %100 = vector.load %arg10[%c0_40, %c0_41] : memref<1x8xf32, #tpu.memory_space<vmem>>, vector<1x8xf32>
    tpu.vector_store %arg10[%c0_40, %c0_41], %99 {strides = array<i32>} : memref<1x8xf32, #tpu.memory_space<vmem>>, vector<1x8xf32>,
    return
  }
  func.func @transform_0(%arg0: i32) -> (i32, i32) {
    %c0_i32 = arith.constant 0 : i32
    %c0_i32_0 = arith.constant 0 : i32
    return %arg0, %c0_i32 : i32, i32
  }
  func.func @transform_1(%arg0: i32) -> (i32, i32) {
    %c0_i32 = arith.constant 0 : i32
    %c0_i32_0 = arith.constant 0 : i32
    %c0_i32_1 = arith.constant 0 : i32
    return %c0_i32, %c0_i32_0 : i32, i32
  }
  func.func @transform_2(%arg0: i32) -> (i32, i32) {
    %c0_i32 = arith.constant 0 : i32
    %c0_i32_0 = arith.constant 0 : i32
    %c0_i32_1 = arith.constant 0 : i32
    return %c0_i32, %c0_i32_0 : i32, i32
  }
  func.func @transform_3(%arg0: i32) -> (i32, i32) {
    %c0_i32 = arith.constant 0 : i32
    %c0_i32_0 = arith.constant 0 : i32
    %c0_i32_1 = arith.constant 0 : i32
    return %c0_i32, %c0_i32_0 : i32, i32
  }
  func.func @transform_4(%arg0: i32) -> (i32, i32) {
    %c0_i32 = arith.constant 0 : i32
    %c0_i32_0 = arith.constant 0 : i32
    %c0_i32_1 = arith.constant 0 : i32
    return %c0_i32, %c0_i32_0 : i32, i32
  }
  func.func @transform_5(%arg0: i32) -> (i32, i32) {
    %c0_i32 = arith.constant 0 : i32
    %c0_i32_0 = arith.constant 0 : i32
    %c0_i32_1 = arith.constant 0 : i32
    return %c0_i32, %c0_i32_0 : i32, i32
  }
  func.func @transform_6(%arg0: i32) -> (i32, i32) {
    %c0_i32 = arith.constant 0 : i32
    %c0_i32_0 = arith.constant 0 : i32
    %c0_i32_1 = arith.constant 0 : i32
    return %c0_i32, %c0_i32_0 : i32, i32
  }
  func.func @transform_7(%arg0: i32) -> (i32, i32) {
    %c0_i32 = arith.constant 0 : i32
    %c0_i32_0 = arith.constant 0 : i32
    %c0_i32_1 = arith.constant 0 : i32
    return %c0_i32, %c0_i32_0 : i32, i32
  }
  func.func @transform_8(%arg0: i32) -> (i32, i32) {
    %c0_i32 = arith.constant 0 : i32
    %c0_i32_0 = arith.constant 0 : i32
    %c0_i32_1 = arith.constant 0 : i32
    return %c0_i32, %c0_i32_0 : i32, i32
  }
  func.func @transform_9(%arg0: i32) -> (i32, i32) {
    %c0_i32 = arith.constant 0 : i32
    %c0_i32_0 = arith.constant 0 : i32
    return %arg0, %c0_i32 : i32, i32
  }
}

</mosaic_0001>

<llo_original>
// kernel: conv1d_classifier_forward.1
$region0: #{conv1d_classifier_forward.1}
  #allocation0 [shape = 'u32[]', space=smem, size = 0x4, offset = 0x4, fixed_abs, tag = 'smem constant byte address 0x4 - core index']
  #allocation1 [shape = 'u32[144,128]{1,0:T(1,128)}', space=vmem, size = 0x12000, scoped, tag = 'internal scratch']
  #allocation2 [shape = 'f32[1,1]{1,0:T(1,128)S(1)}', space=vmem, size = 0x200, scoped, tag = 'scoped memory for conv1d_classifier_forward.1']
  %s0 = inlined_call_operand.vmem [shape: f32[128,34], index: 0, kind: input, shape index: {}]
  %s1 = inlined_call_operand.vmem [shape: bf16[34,384], index: 1, kind: input, shape index: {}]
  %s2 = inlined_call_operand.vmem [shape: f32[1,128], index: 2, kind: input, shape index: {}]
  %s3 = inlined_call_operand.vmem [shape: bf16[128,384], index: 3, kind: input, shape index: {}]
  %s4 = inlined_call_operand.vmem [shape: f32[1,128], index: 4, kind: input, shape index: {}]
  %s5 = inlined_call_operand.vmem [shape: bf16[128,384], index: 5, kind: input, shape index: {}]
  %s6 = inlined_call_operand.vmem [shape: f32[1,128], index: 6, kind: input, shape index: {}]
  %s7 = inlined_call_operand.vmem [shape: f32[1,128], index: 7, kind: input, shape index: {}]
  %s8 = inlined_call_operand.<no memory space> [shape: f32[1,1], index: 8, kind: input, shape index: {}]
  %s9 = inlined_call_operand.hbm [shape: f32[1,8], index: 9, kind: output, shape index: {}]
  %s10 = sld [smem:[#allocation0]]
  $region46: #{conv1d_classifier_forward.1} parent=0
    _
  %s12 = ssub.s32 1, %s10
  %s13 = scalar_select 0, %s12, %s10
  %v14 = vstv %s8
  %15 = vst [vmem:[#allocation2] sm:$0x1] %v14
  $region1: #{conv1d_classifier_forward.1} parent=0
    #allocation3 [shape = 'u8[512]{0}', space=vmem, size = 0x400, scoped, tag = 'output window, operand 0, single buffered']
    #allocation4 [shape = 's32[1]{0}', space=sflag, size = 0x4, scoped, tag = 'scoped memory for conv1d_classifier_forward.1']
    %16 = vsyncpa [#allocation4], 0
    // Predicated region
    $region2: #{conv1d_classifier_forward.1} parent=1 // pred_check
      _
    $region3: #{conv1d_classifier_forward.1} parent=1 // pred_check_branch
      %18 = sbr.rel (0) target = $region5
    $region4: #{conv1d_classifier_forward.1} parent=1 // pred_region
      _
    $region5: #{conv1d_classifier_forward.1} parent=1 // pred_fallthru
      _
    // Predicated region
    $region6: #{conv1d_classifier_forward.1} parent=1 // pred_check
      _
    $region7: #{conv1d_classifier_forward.1} parent=1 // pred_check_branch
      %20 = sbr.rel (0) target = $region9
    $region8: #{conv1d_classifier_forward.1} parent=1 // pred_region
      _
    $region9: #{conv1d_classifier_forward.1} parent=1 // pred_fallthru
      _
    // Predicated region
    $region10: #{conv1d_classifier_forward.1} parent=1 // pred_check
      _
    $region11: #{conv1d_classifier_forward.1} parent=1 // pred_check_branch
      %22 = sbr.rel (0) target = $region13
    $region12: #{conv1d_classifier_forward.1} parent=1 // pred_region
      _
    $region13: #{conv1d_classifier_forward.1} parent=1 // pred_fallthru
      _
    // Predicated region
    $region14: #{conv1d_classifier_forward.1} parent=1 // pred_check
      _
    $region15: #{conv1d_classifier_forward.1} parent=1 // pred_check_branch
      %24 = sbr.rel (0) target = $region17
    $region16: #{conv1d_classifier_forward.1} parent=1 // pred_region
      _
    $region17: #{conv1d_classifier_forward.1} parent=1 // pred_fallthru
      _
    // Predicated region
    $region18: #{conv1d_classifier_forward.1} parent=1 // pred_check
      _
    $region19: #{conv1d_classifier_forward.1} parent=1 // pred_check_branch
      %26 = sbr.rel (0) target = $region21
    $region20: #{conv1d_classifier_forward.1} parent=1 // pred_region
      _
    $region21: #{conv1d_classifier_forward.1} parent=1 // pred_fallthru
      _
    // Predicated region
    $region22: #{conv1d_classifier_forward.1} parent=1 // pred_check
      _
    $region23: #{conv1d_classifier_forward.1} parent=1 // pred_check_branch
      %28 = sbr.rel (0) target = $region25
    $region24: #{conv1d_classifier_forward.1} parent=1 // pred_region
      _
    $region25: #{conv1d_classifier_forward.1} parent=1 // pred_fallthru
      _
    // Predicated region
    $region26: #{conv1d_classifier_forward.1} parent=1 // pred_check
      _
    $region27: #{conv1d_classifier_forward.1} parent=1 // pred_check_branch
      %30 = sbr.rel (0) target = $region29
    $region28: #{conv1d_classifier_forward.1} parent=1 // pred_region
      _
    $region29: #{conv1d_classifier_forward.1} parent=1 // pred_fallthru
      _
    // Predicated region
    $region30: #{conv1d_classifier_forward.1} parent=1 // pred_check
      _
    $region31: #{conv1d_classifier_forward.1} parent=1 // pred_check_branch
      %32 = sbr.rel (0) target = $region33
    $region32: #{conv1d_classifier_forward.1} parent=1 // pred_region
      _
    $region33: #{conv1d_classifier_forward.1} parent=1 // pred_fallthru
      _
    // Predicated region
    $region34: #{conv1d_classifier_forward.1} parent=1 // pred_check
      _
    $region35: #{conv1d_classifier_forward.1} parent=1 // pred_check_branch
      %34 = sbr.rel (0) target = $region37
    $region36: #{conv1d_classifier_forward.1} parent=1 // pred_region
      _
    $region37: #{conv1d_classifier_forward.1} parent=1 // pred_fallthru
      _
    %v36 = vlaneseq
    %v37 = vshrl.u32 %v36, 7
    %v38 = vadd.s32 %v37, 8
    %v39 = vadd.s32 %v37, 16
    %v40 = vadd.s32 %v37, 24
    %v41 = vadd.s32 %v37, 32
    %v42 = vadd.s32 %v37, 40
    %v43 = vadd.s32 %v37, 48
    %v44 = vadd.s32 %v37, 56
    %v45 = vadd.s32 %v37, 64
    %v46 = vadd.s32 %v37, 72
    %v47 = vadd.s32 %v37, 80
    %v48 = vadd.s32 %v37, 88
    %v49 = vadd.s32 %v37, 96
    %v50 = vadd.s32 %v37, 104
    %v51 = vadd.s32 %v37, 112
    %v52 = vadd.s32 %v37, 120
    %vm53 = vcmp.lt.s32.totalorder %v37, 0
    %v54 = vsub.s32 0, %v37
    %v55 = vsel %vm53, %v54, %v37
    %v56 = vshrl.u32 %v55, 4
    %v57 = vand.u32 %v55, 15
    %v58 = vsub.s32 0, %v57
    %v59 = vsel %vm53, %v58, %v57
    %vm60 = vcmp.lt.s32.totalorder %v38, 0
    %v61 = vsub.s32 0, %v38
    %v62 = vsel %vm60, %v61, %v38
    %v63 = vshrl.u32 %v62, 4
    %v64 = vand.u32 %v62, 15
    %v65 = vsub.s32 0, %v64
    %v66 = vsel %vm60, %v65, %v64
    %vm67 = vcmp.lt.s32.totalorder %v39, 0
    %v68 = vsub.s32 0, %v39
    %v69 = vsel %vm67, %v68, %v39
    %v70 = vshrl.u32 %v69, 4
    %v71 = vand.u32 %v69, 15
    %v72 = vsub.s32 0, %v71
    %v73 = vsel %vm67, %v72, %v71
    %vm74 = vcmp.lt.s32.totalorder %v40, 0
    %v75 = vsub.s32 0, %v40
    %v76 = vsel %vm74, %v75, %v40
    %v77 = vshrl.u32 %v76, 4
    %v78 = vand.u32 %v76, 15
    %v79 = vsub.s32 0, %v78
    %v80 = vsel %vm74, %v79, %v78
    %vm81 = vcmp.lt.s32.totalorder %v41, 0
    %v82 = vsub.s32 0, %v41
    %v83 = vsel %vm81, %v82, %v41
    %v84 = vshrl.u32 %v83, 4
    %v85 = vand.u32 %v83, 15
    %v86 = vsub.s32 0, %v85
    %v87 = vsel %vm81, %v86, %v85
    %vm88 = vcmp.lt.s32.totalorder %v42, 0
    %v89 = vsub.s32 0, %v42
    %v90 = vsel %vm88, %v89, %v42
    %v91 = vshrl.u32 %v90, 4
    %v92 = vand.u32 %v90, 15
    %v93 = vsub.s32 0, %v92
    %v94 = vsel %vm88, %v93, %v92
    %vm95 = vcmp.lt.s32.totalorder %v43, 0
    %v96 = vsub.s32 0, %v43
    %v97 = vsel %vm95, %v96, %v43
    %v98 = vshrl.u32 %v97, 4
    %v99 = vand.u32 %v97, 15
    %v100 = vsub.s32 0, %v99
    %v101 = vsel %vm95, %v100, %v99
    %vm102 = vcmp.lt.s32.totalorder %v44, 0
    %v103 = vsub.s32 0, %v44
    %v104 = vsel %vm102, %v103, %v44
    %v105 = vshrl.u32 %v104, 4
    %v106 = vand.u32 %v104, 15
    %v107 = vsub.s32 0, %v106
    %v108 = vsel %vm102, %v107, %v106
    %vm109 = vcmp.lt.s32.totalorder %v45, 0
    %v110 = vsub.s32 0, %v45
    %v111 = vsel %vm109, %v110, %v45
    %v112 = vshrl.u32 %v111, 4
    %v113 = vand.u32 %v111, 15
    %v114 = vsub.s32 0, %v113
    %v115 = vsel %vm109, %v114, %v113
    %vm116 = vcmp.lt.s32.totalorder %v46, 0
    %v117 = vsub.s32 0, %v46
    %v118 = vsel %vm116, %v117, %v46
    %v119 = vshrl.u32 %v118, 4
    %v120 = vand.u32 %v118, 15
    %v121 = vsub.s32 0, %v120
    %v122 = vsel %vm116, %v121, %v120
    %vm123 = vcmp.lt.s32.totalorder %v47, 0
    %v124 = vsub.s32 0, %v47
    %v125 = vsel %vm123, %v124, %v47
    %v126 = vshrl.u32 %v125, 4
    %v127 = vand.u32 %v125, 15
    %v128 = vsub.s32 0, %v127
    %v129 = vsel %vm123, %v128, %v127
    %vm130 = vcmp.lt.s32.totalorder %v48, 0
    %v131 = vsub.s32 0, %v48
    %v132 = vsel %vm130, %v131, %v48
    %v133 = vshrl.u32 %v132, 4
    %v134 = vand.u32 %v132, 15
    %v135 = vsub.s32 0, %v134
    %v136 = vsel %vm130, %v135, %v134
    %vm137 = vcmp.lt.s32.totalorder %v49, 0
    %v138 = vsub.s32 0, %v49
    %v139 = vsel %vm137, %v138, %v49
    %v140 = vshrl.u32 %v139, 4
    %v141 = vand.u32 %v139, 15
    %v142 = vsub.s32 0, %v141
    %v143 = vsel %vm137, %v142, %v141
    %vm144 = vcmp.lt.s32.totalorder %v50, 0
    %v145 = vsub.s32 0, %v50
    %v146 = vsel %vm144, %v145, %v50
    %v147 = vshrl.u32 %v146, 4
    %v148 = vand.u32 %v146, 15
    %v149 = vsub.s32 0, %v148
    %v150 = vsel %vm144, %v149, %v148
    %vm151 = vcmp.lt.s32.totalorder %v51, 0
    %v152 = vsub.s32 0, %v51
    %v153 = vsel %vm151, %v152, %v51
    %v154 = vshrl.u32 %v153, 4
    %v155 = vand.u32 %v153, 15
    %v156 = vsub.s32 0, %v155
    %v157 = vsel %vm151, %v156, %v155
    %vm158 = vcmp.lt.s32.totalorder %v52, 0
    %v159 = vsub.s32 0, %v52
    %v160 = vsel %vm158, %v159, %v52
    %v161 = vshrl.u32 %v160, 4
    %v162 = vand.u32 %v160, 15
    %v163 = vsub.s32 0, %v162
    %v164 = vsel %vm158, %v163, %v162
    %vm165 = vcmp.ne.s32.totalorder %v59, 0
    %vm166 = vcmp.ne.s32.totalorder %v66, 0
    %vm167 = vcmp.ne.s32.totalorder %v73, 0
    %vm168 = vcmp.ne.s32.totalorder %v80, 0
    %vm169 = vcmp.ne.s32.totalorder %v87, 0
    %vm170 = vcmp.ne.s32.totalorder %v94, 0
    %vm171 = vcmp.ne.s32.totalorder %v101, 0
    %vm172 = vcmp.ne.s32.totalorder %v108, 0
    %vm173 = vcmp.ne.s32.totalorder %v115, 0
    %vm174 = vcmp.ne.s32.totalorder %v122, 0
    %vm175 = vcmp.ne.s32.totalorder %v129, 0
    %vm176 = vcmp.ne.s32.totalorder %v136, 0
    %vm177 = vcmp.ne.s32.totalorder %v143, 0
    %vm178 = vcmp.ne.s32.totalorder %v150, 0
    %vm179 = vcmp.ne.s32.totalorder %v157, 0
    %vm180 = vcmp.ne.s32.totalorder %v164, 0
    %vm181 = vcmp.lt.s32.totalorder %v59, 0
    %vm182 = vcmp.lt.s32.totalorder %v66, 0
    %vm183 = vcmp.lt.s32.totalorder %v73, 0
    %vm184 = vcmp.lt.s32.totalorder %v80, 0
    %vm185 = vcmp.lt.s32.totalorder %v87, 0
    %vm186 = vcmp.lt.s32.totalorder %v94, 0
    %vm187 = vcmp.lt.s32.totalorder %v101, 0
    %vm188 = vcmp.lt.s32.totalorder %v108, 0
    %vm189 = vcmp.lt.s32.totalorder %v115, 0
    %vm190 = vcmp.lt.s32.totalorder %v122, 0
    %vm191 = vcmp.lt.s32.totalorder %v129, 0
    %vm192 = vcmp.lt.s32.totalorder %v136, 0
    %vm193 = vcmp.lt.s32.totalorder %v143, 0
    %vm194 = vcmp.lt.s32.totalorder %v150, 0
    %vm195 = vcmp.lt.s32.totalorder %v157, 0
    %vm196 = vcmp.lt.s32.totalorder %v164, 0
    %vm197 = vmand %vm181, %vm165
    %vm198 = vmand %vm182, %vm166
    %vm199 = vmand %vm183, %vm167
    %vm200 = vmand %vm184, %vm168
    %vm201 = vmand %vm185, %vm169
    %vm202 = vmand %vm186, %vm170
    %vm203 = vmand %vm187, %vm171
    %vm204 = vmand %vm188, %vm172
    %vm205 = vmand %vm189, %vm173
    %vm206 = vmand %vm190, %vm174
    %vm207 = vmand %vm191, %vm175
    %vm208 = vmand %vm192, %vm176
    %vm209 = vmand %vm193, %vm177
    %vm210 = vmand %vm194, %vm178
    %vm211 = vmand %vm195, %vm179
    %vm212 = vmand %vm196, %vm180
    %v213 = vadd.s32 %v59, 16
    %v214 = vadd.s32 %v66, 16
    %v215 = vadd.s32 %v73, 16
    %v216 = vadd.s32 %v80, 16
    %v217 = vadd.s32 %v87, 16
    %v218 = vadd.s32 %v94, 16
    %v219 = vadd.s32 %v101, 16
    %v220 = vadd.s32 %v108, 16
    %v221 = vadd.s32 %v115, 16
    %v222 = vadd.s32 %v122, 16
    %v223 = vadd.s32 %v129, 16
    %v224 = vadd.s32 %v136, 16
    %v225 = vadd.s32 %v143, 16
    %v226 = vadd.s32 %v150, 16
    %v227 = vadd.s32 %v157, 16
    %v228 = vadd.s32 %v164, 16
    %v229 = vsel %vm197, %v213, %v59
    %v230 = vsel %vm198, %v214, %v66
    %v231 = vsel %vm199, %v215, %v73
    %v232 = vsel %vm200, %v216, %v80
    %v233 = vsel %vm201, %v217, %v87
    %v234 = vsel %vm202, %v218, %v94
    %v235 = vsel %vm203, %v219, %v101
    %v236 = vsel %vm204, %v220, %v108
    %v237 = vsel %vm205, %v221, %v115
    %v238 = vsel %vm206, %v222, %v122
    %v239 = vsel %vm207, %v223, %v129
    %v240 = vsel %vm208, %v224, %v136
    %v241 = vsel %vm209, %v225, %v143
    %v242 = vsel %vm210, %v226, %v150
    %v243 = vsel %vm211, %v227, %v157
    %v244 = vsel %vm212, %v228, %v164
    %vm245 = vcmp.eq.s32.totalorder %v229, 0
    %vm246 = vcmp.eq.s32.totalorder %v230, 0
    %vm247 = vcmp.eq.s32.totalorder %v231, 0
    %vm248 = vcmp.eq.s32.totalorder %v232, 0
    %vm249 = vcmp.eq.s32.totalorder %v233, 0
    %vm250 = vcmp.eq.s32.totalorder %v234, 0
    %vm251 = vcmp.eq.s32.totalorder %v235, 0
    %vm252 = vcmp.eq.s32.totalorder %v236, 0
    %vm253 = vcmp.eq.s32.totalorder %v237, 0
    %vm254 = vcmp.eq.s32.totalorder %v238, 0
    %vm255 = vcmp.eq.s32.totalorder %v239, 0
    %vm256 = vcmp.eq.s32.totalorder %v240, 0
    %vm257 = vcmp.eq.s32.totalorder %v241, 0
    %vm258 = vcmp.eq.s32.totalorder %v242, 0
    %vm259 = vcmp.eq.s32.totalorder %v243, 0
    %vm260 = vcmp.eq.s32.totalorder %v244, 0
    %vm261 = vcmp.eq.s32.totalorder %v229, 15
    %vm262 = vcmp.eq.s32.totalorder %v230, 15
    %vm263 = vcmp.eq.s32.totalorder %v231, 15
    %vm264 = vcmp.eq.s32.totalorder %v232, 15
    %vm265 = vcmp.eq.s32.totalorder %v233, 15
    %vm266 = vcmp.eq.s32.totalorder %v234, 15
    %vm267 = vcmp.eq.s32.totalorder %v235, 15
    %vm268 = vcmp.eq.s32.totalorder %v236, 15
    %vm269 = vcmp.eq.s32.totalorder %v237, 15
    %vm270 = vcmp.eq.s32.totalorder %v238, 15
    %vm271 = vcmp.eq.s32.totalorder %v239, 15
    %vm272 = vcmp.eq.s32.totalorder %v240, 15
    %vm273 = vcmp.eq.s32.totalorder %v241, 15
    %vm274 = vcmp.eq.s32.totalorder %v242, 15
    %vm275 = vcmp.eq.s32.totalorder %v243, 15
    %vm276 = vcmp.eq.s32.totalorder %v244, 15
    %v277 = vld [vmem:[%s0] sm:$0xff]
    %v278 = vld [vmem:[%s0 + $0x8] sm:$0xff]
    %v279 = vld [vmem:[%s0 + $0x10] sm:$0xff]
    %v280 = vld [vmem:[%s0 + $0x18] sm:$0xff]
    %v281 = vld [vmem:[%s0 + $0x20] sm:$0xff]
    %v282 = vld [vmem:[%s0 + $0x28] sm:$0xff]
    %v283 = vld [vmem:[%s0 + $0x30] sm:$0xff]
    %v284 = vld [vmem:[%s0 + $0x38] sm:$0xff]
    %v285 = vld [vmem:[%s0 + $0x40] sm:$0xff]
    %v286 = vld [vmem:[%s0 + $0x48] sm:$0xff]
    %v287 = vld [vmem:[%s0 + $0x50] sm:$0xff]
    %v288 = vld [vmem:[%s0 + $0x58] sm:$0xff]
    %v289 = vld [vmem:[%s0 + $0x60] sm:$0xff]
    %v290 = vld [vmem:[%s0 + $0x68] sm:$0xff]
    %v291 = vld [vmem:[%s0 + $0x70] sm:$0xff]
    %v292 = vld [vmem:[%s0 + $0x78] sm:$0xff]
    %v293 = vpack.c.bf16 %v278, %v277
    %v294 = vpack.c.bf16 %v280, %v279
    %v295 = vpack.c.bf16 %v282, %v281
    %v296 = vpack.c.bf16 %v284, %v283
    %v297 = vpack.c.bf16 %v286, %v285
    %v298 = vpack.c.bf16 %v288, %v287
    %v299 = vpack.c.bf16 %v290, %v289
    %v300 = vpack.c.bf16 %v292, %v291
    %v301 = vld [vmem:[%s1] sm:$0xff]
    %v302 = vld [vmem:[%s1 + $0x8] sm:$0xf]
    %v303 = vld [vmem:[%s1 + $0xc] sm:$0xff]
    %v304 = vld [vmem:[%s1 + $0x14] sm:$0xf]
    %v305 = vld [vmem:[%s1 + $0x18] sm:$0xff]
    %v306 = vld [vmem:[%s1 + $0x20] sm:$0xf]
    %v307 = vld [vmem:[%s1 + $0x24] sm:$0xff]
    %v308 = vld [vmem:[%s1 + $0x2c] sm:$0xf]
    %v309 = vld [vmem:[%s1 + $0x30] sm:$0x11]
    %v310 = vld [vmem:[%s1 + $0x38] sm:$0x1]
    %v321 = vunpack.c.l.b16 %v301
    %v322 = vunpack.c.h.b16 %v301
    %v323 = vunpack.c.l.b16 %v302
    %v324 = vunpack.c.l.b16 %v303
    %v325 = vunpack.c.h.b16 %v303
    %v326 = vunpack.c.l.b16 %v304
    %v327 = vunpack.c.l.b16 %v305
    %v328 = vunpack.c.h.b16 %v305
    %v329 = vunpack.c.l.b16 %v306
    %v330 = vunpack.c.l.b16 %v307
    %v331 = vunpack.c.h.b16 %v307
    %v332 = vunpack.c.l.b16 %v308
    %v333 = vunpack.c.l.b16 %v309
    %v334 = vunpack.c.h.b16 %v309
    %v335 = vunpack.c.l.b16 %v310
    %v336 = vpack.c.b16 %v324, %v321
    %v337 = vpack.c.b16 %v325, %v322
    %v338 = vpack.c.b16 %v326, %v323
    %v339 = vpack.c.b16 %v330, %v327
    %v340 = vpack.c.b16 %v331, %v328
    %v341 = vpack.c.b16 %v332, %v329
    %v342 = vpack.c.b16 %v333, %v333
    %v343 = vpack.c.b16 %v334, %v334
    %v344 = vpack.c.b16 %v335, %v335
    %vm351 = vcmask 277504
    %v353 = vsel %vm351, %v293, 0
    %v356 = vsel %vm351, %v294, 0
    %v359 = vsel %vm351, %v295, 0
    %v362 = vsel %vm351, %v296, 0
    %v365 = vsel %vm351, %v297, 0
    %v368 = vsel %vm351, %v298, 0
    %v371 = vsel %vm351, %v299, 0
    %v374 = vsel %vm351, %v300, 0
    %vm376 = vcmask 1040384
    %v378 = vsel %vm376, %v342, 0
    %v381 = vsel %vm376, %v343, 0
    %v384 = vsel %vm376, %v344, 0
    %386 = vmatprep.subr.bf16.mxu0 %v337
    %387 = vmatpush1.bf16.msra.mxu0 %v336
    %388 = vmatprep.subr.bf16.mxu0 %v340
    %389 = vmatpush1.bf16.msra.mxu0 %v339
    %390 = vmatprep.subr.bf16.mxu0 %v381
    %391 = vmatpush1.bf16.msra.mxu0 %v378
    %392 = vmatprep.subr.bf16.mxu0 0
    %393 = vmatpush1.bf16.msra.mxu0 0
    %394 = vmatprep.subr.bf16.mxu0 0
    %395 = vmatpush1.bf16.msra.mxu0 0
    %396 = vmatprep.subr.bf16.mxu0 0
    %397 = vmatpush1.bf16.msra.mxu0 0
    %398 = vmatprep.subr.bf16.mxu0 0
    %399 = vmatpush1.bf16.msra.mxu0 0
    %400 = vmatprep.subr.bf16.mxu0 0
    %401 = vmatpush1.bf16.msra.mxu0 0
    %402 = vmatprep.subr.bf16.mxu0 0
    %403 = vmatpush1.bf16.msra.mxu0 0
    %404 = vmatprep.subr.bf16.mxu0 0
    %405 = vmatpush1.bf16.msra.mxu0 0
    %406 = vmatprep.subr.bf16.mxu0 0
    %407 = vmatpush1.bf16.msra.mxu0 0
    %408 = vmatprep.subr.bf16.mxu0 0
    %409 = vmatpush1.bf16.msra.mxu0 0
    %410 = vmatprep.subr.bf16.mxu0 0
    %411 = vmatpush1.bf16.msra.mxu0 0
    %412 = vmatprep.subr.bf16.mxu0 0
    %413 = vmatpush1.bf16.msra.mxu0 0
    %414 = vmatprep.subr.bf16.mxu0 0
    %415 = vmatpush1.bf16.msra.mxu0 0
    %416 = vmatprep.subr.bf16.mxu0 0
    %417 = vmatpush1.bf16.msra.mxu0 0
    %418 = vmatprep.mubr.bf16.mxu0 0
    %419 = vmatmul.mubr.bf16.gmra.mrb[0].mxu0 %v353
    %v420 = vpop.f32.mrb[0].mxu0
    %v421 = vadd.f32 0.0, %v420
    %v422 = vpop.f32.mrb[0].mxu0
    %v423 = vadd.f32 0.0, %v422
    %v424 = vpop.f32.mrb[0].mxu0
    %v425 = vadd.f32 0.0, %v424
    %v426 = vpop.f32.mrb[0].mxu0
    %v427 = vadd.f32 0.0, %v426
    %428 = vmatprep.mubr.bf16.mxu0 0
    %429 = vmatmul.mubr.bf16.gmra.mrb[0].mxu0 %v356
    %v430 = vpop.f32.mrb[0].mxu0
    %v431 = vadd.f32 0.0, %v430
    %v432 = vpop.f32.mrb[0].mxu0
    %v433 = vadd.f32 0.0, %v432
    %v434 = vpop.f32.mrb[0].mxu0
    %v435 = vadd.f32 0.0, %v434
    %v436 = vpop.f32.mrb[0].mxu0
    %v437 = vadd.f32 0.0, %v436
    %438 = vmatprep.mubr.bf16.mxu0 0
    %439 = vmatmul.mubr.bf16.gmra.mrb[0].mxu0 %v359
    %v440 = vpop.f32.mrb[0].mxu0
    %v441 = vadd.f32 0.0, %v440
    %v442 = vpop.f32.mrb[0].mxu0
    %v443 = vadd.f32 0.0, %v442
    %v444 = vpop.f32.mrb[0].mxu0
    %v445 = vadd.f32 0.0, %v444
    %v446 = vpop.f32.mrb[0].mxu0
    %v447 = vadd.f32 0.0, %v446
    %448 = vmatprep.mubr.bf16.mxu0 0
    %449 = vmatmul.mubr.bf16.gmra.mrb[0].mxu0 %v362
    %v450 = vpop.f32.mrb[0].mxu0
    %v451 = vadd.f32 0.0, %v450
    %v452 = vpop.f32.mrb[0].mxu0
    %v453 = vadd.f32 0.0, %v452
    %v454 = vpop.f32.mrb[0].mxu0
    %v455 = vadd.f32 0.0, %v454
    %v456 = vpop.f32.mrb[0].mxu0
    %v457 = vadd.f32 0.0, %v456
    %458 = vmatprep.mubr.bf16.mxu0 0
    %459 = vmatmul.mubr.bf16.gmra.mrb[0].mxu0 %v365
    %v460 = vpop.f32.mrb[0].mxu0
    %v461 = vadd.f32 0.0, %v460
    %v462 = vpop.f32.mrb[0].mxu0
    %v463 = vadd.f32 0.0, %v462
    %v464 = vpop.f32.mrb[0].mxu0
    %v465 = vadd.f32 0.0, %v464
    %v466 = vpop.f32.mrb[0].mxu0
    %v467 = vadd.f32 0.0, %v466
    %468 = vmatprep.mubr.bf16.mxu0 0
    %469 = vmatmul.mubr.bf16.gmra.mrb[0].mxu0 %v368
    %v470 = vpop.f32.mrb[0].mxu0
    %v471 = vadd.f32 0.0, %v470
    %v472 = vpop.f32.mrb[0].mxu0
    %v473 = vadd.f32 0.0, %v472
    %v474 = vpop.f32.mrb[0].mxu0
    %v475 = vadd.f32 0.0, %v474
    %v476 = vpop.f32.mrb[0].mxu0
    %v477 = vadd.f32 0.0, %v476
    %478 = vmatprep.mubr.bf16.mxu0 0
    %479 = vmatmul.mubr.bf16.gmra.mrb[0].mxu0 %v371
    %v480 = vpop.f32.mrb[0].mxu0
    %v481 = vadd.f32 0.0, %v480
    %v482 = vpop.f32.mrb[0].mxu0
    %v483 = vadd.f32 0.0, %v482
    %v484 = vpop.f32.mrb[0].mxu0
    %v485 = vadd.f32 0.0, %v484
    %v486 = vpop.f32.mrb[0].mxu0
    %v487 = vadd.f32 0.0, %v486
    %488 = vmatprep.mubr.bf16.mxu0 0
    %489 = vmatmul.mubr.bf16.gmra.mrb[0].mxu0 %v374
    %v490 = vpop.f32.mrb[0].mxu0
    %v491 = vadd.f32 0.0, %v490
    %v492 = vpop.f32.mrb[0].mxu0
    %v493 = vadd.f32 0.0, %v492
    %v494 = vpop.f32.mrb[0].mxu0
    %v495 = vadd.f32 0.0, %v494
    %v496 = vpop.f32.mrb[0].mxu0
    %v497 = vadd.f32 0.0, %v496
    %498 = vdwg.mxu0
    %499 = vmatprep.subr.bf16.mxu0 0
    %500 = vmatpush1.bf16.msra.mxu0 %v338
    %501 = vmatprep.subr.bf16.mxu0 0
    %502 = vmatpush1.bf16.msra.mxu0 %v341
    %503 = vmatprep.subr.bf16.mxu0 0
    %504 = vmatpush1.bf16.msra.mxu0 %v384
    %505 = vmatprep.subr.bf16.mxu0 0
    %506 = vmatpush1.bf16.msra.mxu0 0
    %507 = vmatprep.subr.bf16.mxu0 0
    %508 = vmatpush1.bf16.msra.mxu0 0
    %509 = vmatprep.subr.bf16.mxu0 0
    %510 = vmatpush1.bf16.msra.mxu0 0
    %511 = vmatprep.subr.bf16.mxu0 0
    %512 = vmatpush1.bf16.msra.mxu0 0
    %513 = vmatprep.subr.bf16.mxu0 0
    %514 = vmatpush1.bf16.msra.mxu0 0
    %515 = vmatprep.subr.bf16.mxu0 0
    %516 = vmatpush1.bf16.msra.mxu0 0
    %517 = vmatprep.subr.bf16.mxu0 0
    %518 = vmatpush1.bf16.msra.mxu0 0
    %519 = vmatprep.subr.bf16.mxu0 0
    %520 = vmatpush1.bf16.msra.mxu0 0
    %521 = vmatprep.subr.bf16.mxu0 0
    %522 = vmatpush1.bf16.msra.mxu0 0
    %523 = vmatprep.subr.bf16.mxu0 0
    %524 = vmatpush1.bf16.msra.mxu0 0
    %525 = vmatprep.subr.bf16.mxu0 0
    %526 = vmatpush1.bf16.msra.mxu0 0
    %527 = vmatprep.subr.bf16.mxu0 0
    %528 = vmatpush1.bf16.msra.mxu0 0
    %529 = vmatprep.subr.bf16.mxu0 0
    %530 = vmatpush1.bf16.msra.mxu0 0
    %531 = vmatprep.mubr.bf16.mxu0 0
    %532 = vmatmul.mubr.bf16.gmra.mrb[0].mxu0 %v353
    %v533 = vpop.f32.mrb[0].mxu0
    %v534 = vadd.f32 0.0, %v533
    %v535 = vpop.f32.mrb[0].mxu0
    %v536 = vpop.f32.mrb[0].mxu0
    %v537 = vadd.f32 0.0, %v536
    %v538 = vpop.f32.mrb[0].mxu0
    %539 = vmatprep.mubr.bf16.mxu0 0
    %540 = vmatmul.mubr.bf16.gmra.mrb[0].mxu0 %v356
    %v541 = vpop.f32.mrb[0].mxu0
    %v542 = vadd.f32 0.0, %v541
    %v543 = vpop.f32.mrb[0].mxu0
    %v544 = vpop.f32.mrb[0].mxu0
    %v545 = vadd.f32 0.0, %v544
    %v546 = vpop.f32.mrb[0].mxu0
    %547 = vmatprep.mubr.bf16.mxu0 0
    %548 = vmatmul.mubr.bf16.gmra.mrb[0].mxu0 %v359
    %v549 = vpop.f32.mrb[0].mxu0
    %v550 = vadd.f32 0.0, %v549
    %v551 = vpop.f32.mrb[0].mxu0
    %v552 = vpop.f32.mrb[0].mxu0
    %v553 = vadd.f32 0.0, %v552
    %v554 = vpop.f32.mrb[0].mxu0
    %555 = vmatprep.mubr.bf16.mxu0 0
    %556 = vmatmul.mubr.bf16.gmra.mrb[0].mxu0 %v362
    %v557 = vpop.f32.mrb[0].mxu0
    %v558 = vadd.f32 0.0, %v557
    %v559 = vpop.f32.mrb[0].mxu0
    %v560 = vpop.f32.mrb[0].mxu0
    %v561 = vadd.f32 0.0, %v560
    %v562 = vpop.f32.mrb[0].mxu0
    %563 = vmatprep.mubr.bf16.mxu0 0
    %564 = vmatmul.mubr.bf16.gmra.mrb[0].mxu0 %v365
    %v565 = vpop.f32.mrb[0].mxu0
    %v566 = vadd.f32 0.0, %v565
    %v567 = vpop.f32.mrb[0].mxu0
    %v568 = vpop.f32.mrb[0].mxu0
    %v569 = vadd.f32 0.0, %v568
    %v570 = vpop.f32.mrb[0].mxu0
    %571 = vmatprep.mubr.bf16.mxu0 0
    %572 = vmatmul.mubr.bf16.gmra.mrb[0].mxu0 %v368
    %v573 = vpop.f32.mrb[0].mxu0
    %v574 = vadd.f32 0.0, %v573
    %v575 = vpop.f32.mrb[0].mxu0
    %v576 = vpop.f32.mrb[0].mxu0
    %v577 = vadd.f32 0.0, %v576
    %v578 = vpop.f32.mrb[0].mxu0
    %579 = vmatprep.mubr.bf16.mxu0 0
    %580 = vmatmul.mubr.bf16.gmra.mrb[0].mxu0 %v371
    %v581 = vpop.f32.mrb[0].mxu0
    %v582 = vadd.f32 0.0, %v581
    %v583 = vpop.f32.mrb[0].mxu0
    %v584 = vpop.f32.mrb[0].mxu0
    %v585 = vadd.f32 0.0, %v584
    %v586 = vpop.f32.mrb[0].mxu0
    %587 = vmatprep.mubr.bf16.mxu0 0
    %588 = vmatmul.mubr.bf16.gmra.mrb[0].mxu0 %v374
    %v589 = vpop.f32.mrb[0].mxu0
    %v590 = vadd.f32 0.0, %v589
    %v591 = vpop.f32.mrb[0].mxu0
    %v592 = vpop.f32.mrb[0].mxu0
    %v593 = vadd.f32 0.0, %v592
    %v594 = vpop.f32.mrb[0].mxu0
    %595 = vdwg.mxu0
    %v596 = vrot.slane %v421, 7
    %v597 = vrot.slane %v425, 7
    %v598 = vrot.slane %v431, 7
    %v599 = vrot.slane %v435, 7
    %v600 = vrot.slane %v441, 7
    %v601 = vrot.slane %v445, 7
    %v602 = vrot.slane %v451, 7
    %v603 = vrot.slane %v455, 7
    %v604 = vrot.slane %v461, 7
    %v605 = vrot.slane %v465, 7
    %v606 = vrot.slane %v471, 7
    %v607 = vrot.slane %v475, 7
    %v608 = vrot.slane %v481, 7
    %v609 = vrot.slane %v485, 7
    %v610 = vrot.slane %v491, 7
    %v611 = vrot.slane %v495, 7
    %vm612 = vcmp.lt.s32.totalorder %v37, 1
    %v613 = vsel %vm612, %v610, %v611
    %v614 = vsel %vm612, %v609, %v610
    %v615 = vsel %vm612, %v608, %v609
    %v616 = vsel %vm612, %v607, %v608
    %v617 = vsel %vm612, %v606, %v607
    %v618 = vsel %vm612, %v605, %v606
    %v619 = vsel %vm612, %v604, %v605
    %v620 = vsel %vm612, %v603, %v604
    %v621 = vsel %vm612, %v602, %v603
    %v622 = vsel %vm612, %v601, %v602
    %v623 = vsel %vm612, %v600, %v601
    %v624 = vsel %vm612, %v599, %v600
    %v625 = vsel %vm612, %v598, %v599
    %v626 = vsel %vm612, %v597, %v598
    %v627 = vsel %vm612, %v596, %v597
    %v628 = vsel %vm612, %v611, %v596
    %v629 = vsel %vm245, 1, 0
    %v630 = vsel %vm246, 1, 0
    %v631 = vsel %vm247, 1, 0
    %v632 = vsel %vm248, 1, 0
    %v633 = vsel %vm249, 1, 0
    %v634 = vsel %vm250, 1, 0
    %v635 = vsel %vm251, 1, 0
    %v636 = vsel %vm252, 1, 0
    %v637 = vsel %vm253, 1, 0
    %v638 = vsel %vm254, 1, 0
    %v639 = vsel %vm255, 1, 0
    %v640 = vsel %vm256, 1, 0
    %v641 = vsel %vm257, 1, 0
    %v642 = vsel %vm258, 1, 0
    %v643 = vsel %vm259, 1, 0
    %v644 = vsel %vm260, 1, 0
    %vm645 = vcmp.eq.s32.totalorder %v629, 1
    %vm646 = vcmp.eq.s32.totalorder %v630, 1
    %vm647 = vcmp.eq.s32.totalorder %v631, 1
    %vm648 = vcmp.eq.s32.totalorder %v632, 1
    %vm649 = vcmp.eq.s32.totalorder %v633, 1
    %vm650 = vcmp.eq.s32.totalorder %v634, 1
    %vm651 = vcmp.eq.s32.totalorder %v635, 1
    %vm652 = vcmp.eq.s32.totalorder %v636, 1
    %vm653 = vcmp.eq.s32.totalorder %v637, 1
    %vm654 = vcmp.eq.s32.totalorder %v638, 1
    %vm655 = vcmp.eq.s32.totalorder %v639, 1
    %vm656 = vcmp.eq.s32.totalorder %v640, 1
    %vm657 = vcmp.eq.s32.totalorder %v641, 1
    %vm658 = vcmp.eq.s32.totalorder %v642, 1
    %vm659 = vcmp.eq.s32.totalorder %v643, 1
    %vm660 = vcmp.eq.s32.totalorder %v644, 1
    %v661 = vsel %vm645, 0.0, %v628
    %v662 = vsel %vm646, 0.0, %v627
    %v663 = vsel %vm647, 0.0, %v626
    %v664 = vsel %vm648, 0.0, %v625
    %v665 = vsel %vm649, 0.0, %v624
    %v666 = vsel %vm650, 0.0, %v623
    %v667 = vsel %vm651, 0.0, %v622
    %v668 = vsel %vm652, 0.0, %v621
    %v669 = vsel %vm653, 0.0, %v620
    %v670 = vsel %vm654, 0.0, %v619
    %v671 = vsel %vm655, 0.0, %v618
    %v672 = vsel %vm656, 0.0, %v617
    %v673 = vsel %vm657, 0.0, %v616
    %v674 = vsel %vm658, 0.0, %v615
    %v675 = vsel %vm659, 0.0, %v614
    %v676 = vsel %vm660, 0.0, %v613
    %v677 = vrot.slane %v534, 1
    %v678 = vrot.slane %v537, 1
    %v679 = vrot.slane %v542, 1
    %v680 = vrot.slane %v545, 1
    %v681 = vrot.slane %v550, 1
    %v682 = vrot.slane %v553, 1
    %v683 = vrot.slane %v558, 1
    %v684 = vrot.slane %v561, 1
    %v685 = vrot.slane %v566, 1
    %v686 = vrot.slane %v569, 1
    %v687 = vrot.slane %v574, 1
    %v688 = vrot.slane %v577, 1
    %v689 = vrot.slane %v582, 1
    %v690 = vrot.slane %v585, 1
    %v691 = vrot.slane %v590, 1
    %v692 = vrot.slane %v593, 1
    %vm693 = vcmp.lt.s32.totalorder %v37, 7
    %v694 = vsel %vm693, %v691, %v692
    %v695 = vsel %vm693, %v690, %v691
    %v696 = vsel %vm693, %v689, %v690
    %v697 = vsel %vm693, %v688, %v689
    %v698 = vsel %vm693, %v687, %v688
    %v699 = vsel %vm693, %v686, %v687
    %v700 = vsel %vm693, %v685, %v686
    %v701 = vsel %vm693, %v684, %v685
    %v702 = vsel %vm693, %v683, %v684
    %v703 = vsel %vm693, %v682, %v683
    %v704 = vsel %vm693, %v681, %v682
    %v705 = vsel %vm693, %v680, %v681
    %v706 = vsel %vm693, %v679, %v680
    %v707 = vsel %vm693, %v678, %v679
    %v708 = vsel %vm693, %v677, %v678
    %v709 = vsel %vm693, %v692, %v677
    %v710 = vsel %vm261, 1, 0
    %v711 = vsel %vm262, 1, 0
    %v712 = vsel %vm263, 1, 0
    %v713 = vsel %vm264, 1, 0
    %v714 = vsel %vm265, 1, 0
    %v715 = vsel %vm266, 1, 0
    %v716 = vsel %vm267, 1, 0
    %v717 = vsel %vm268, 1, 0
    %v718 = vsel %vm269, 1, 0
    %v719 = vsel %vm270, 1, 0
    %v720 = vsel %vm271, 1, 0
    %v721 = vsel %vm272, 1, 0
    %v722 = vsel %vm273, 1, 0
    %v723 = vsel %vm274, 1, 0
    %v724 = vsel %vm275, 1, 0
    %v725 = vsel %vm276, 1, 0
    %vm726 = vcmp.eq.s32.totalorder %v710, 1
    %vm727 = vcmp.eq.s32.totalorder %v711, 1
    %vm728 = vcmp.eq.s32.totalorder %v712, 1
    %vm729 = vcmp.eq.s32.totalorder %v713, 1
    %vm730 = vcmp.eq.s32.totalorder %v714, 1
    %vm731 = vcmp.eq.s32.totalorder %v715, 1
    %vm732 = vcmp.eq.s32.totalorder %v716, 1
    %vm733 = vcmp.eq.s32.totalorder %v717, 1
    %vm734 = vcmp.eq.s32.totalorder %v718, 1
    %vm735 = vcmp.eq.s32.totalorder %v719, 1
    %vm736 = vcmp.eq.s32.totalorder %v720, 1
    %vm737 = vcmp.eq.s32.totalorder %v721, 1
    %vm738 = vcmp.eq.s32.totalorder %v722, 1
    %vm739 = vcmp.eq.s32.totalorder %v723, 1
    %vm740 = vcmp.eq.s32.totalorder %v724, 1
    %vm741 = vcmp.eq.s32.totalorder %v725, 1
    %v742 = vsel %vm726, 0.0, %v708
    %v743 = vsel %vm727, 0.0, %v707
    %v744 = vsel %vm728, 0.0, %v706
    %v745 = vsel %vm729, 0.0, %v705
    %v746 = vsel %vm730, 0.0, %v704
    %v747 = vsel %vm731, 0.0, %v703
    %v748 = vsel %vm732, 0.0, %v702
    %v749 = vsel %vm733, 0.0, %v701
    %v750 = vsel %vm734, 0.0, %v700
    %v751 = vsel %vm735, 0.0, %v699
    %v752 = vsel %vm736, 0.0, %v698
    %v753 = vsel %vm737, 0.0, %v697
    %v754 = vsel %vm738, 0.0, %v696
    %v755 = vsel %vm739, 0.0, %v695
    %v756 = vsel %vm740, 0.0, %v694
    %v757 = vsel %vm741, 0.0, %v709
    %v758 = vadd.f32 %v661, %v423
    %v759 = vadd.f32 %v662, %v427
    %v760 = vadd.f32 %v663, %v433
    %v761 = vadd.f32 %v664, %v437
    %v762 = vadd.f32 %v665, %v443
    %v763 = vadd.f32 %v666, %v447
    %v764 = vadd.f32 %v667, %v453
    %v765 = vadd.f32 %v668, %v457
    %v766 = vadd.f32 %v669, %v463
    %v767 = vadd.f32 %v670, %v467
    %v768 = vadd.f32 %v671, %v473
    %v769 = vadd.f32 %v672, %v477
    %v770 = vadd.f32 %v673, %v483
    %v771 = vadd.f32 %v674, %v487
    %v772 = vadd.f32 %v675, %v493
    %v773 = vadd.f32 %v676, %v497
    %v774 = vadd.f32 %v758, %v742
    %v775 = vadd.f32 %v759, %v743
    %v776 = vadd.f32 %v760, %v744
    %v777 = vadd.f32 %v761, %v745
    %v778 = vadd.f32 %v762, %v746
    %v779 = vadd.f32 %v763, %v747
    %v780 = vadd.f32 %v764, %v748
    %v781 = vadd.f32 %v765, %v749
    %v782 = vadd.f32 %v766, %v750
    %v783 = vadd.f32 %v767, %v751
    %v784 = vadd.f32 %v768, %v752
    %v785 = vadd.f32 %v769, %v753
    %v786 = vadd.f32 %v770, %v754
    %v787 = vadd.f32 %v771, %v755
    %v788 = vadd.f32 %v772, %v756
    %v789 = vadd.f32 %v773, %v757
    %v790 = vld [vmem:[%s2] sm:$0x1]
    %v792 = vlaneseq
    %v793 = vshrl.u32 %v792, 7
    %v794 = vsub.s32 0, %v793
    %v795 = vrot.slane %v790, %v794
    %v797 = vadd.f32 %v774, %v795
    %v798 = vadd.f32 %v775, %v795
    %v799 = vadd.f32 %v776, %v795
    %v800 = vadd.f32 %v777, %v795
    %v801 = vadd.f32 %v778, %v795
    %v802 = vadd.f32 %v779, %v795
    %v803 = vadd.f32 %v780, %v795
    %v804 = vadd.f32 %v781, %v795
    %v805 = vadd.f32 %v782, %v795
    %v806 = vadd.f32 %v783, %v795
    %v807 = vadd.f32 %v784, %v795
    %v808 = vadd.f32 %v785, %v795
    %v809 = vadd.f32 %v786, %v795
    %v810 = vadd.f32 %v787, %v795
    %v811 = vadd.f32 %v788, %v795
    %v812 = vadd.f32 %v789, %v795
    %v813 = vmax.f32 %v797, 0.0
    %v814 = vmax.f32 %v798, 0.0
    %v815 = vmax.f32 %v799, 0.0
    %v816 = vmax.f32 %v800, 0.0
    %v817 = vmax.f32 %v801, 0.0
    %v818 = vmax.f32 %v802, 0.0
    %v819 = vmax.f32 %v803, 0.0
    %v820 = vmax.f32 %v804, 0.0
    %v821 = vmax.f32 %v805, 0.0
    %v822 = vmax.f32 %v806, 0.0
    %v823 = vmax.f32 %v807, 0.0
    %v824 = vmax.f32 %v808, 0.0
    %v825 = vmax.f32 %v809, 0.0
    %v826 = vmax.f32 %v810, 0.0
    %v827 = vmax.f32 %v811, 0.0
    %v828 = vmax.f32 %v812, 0.0
    %v829 = vpack.c.bf16 %v814, %v813
    %v830 = vpack.c.bf16 %v816, %v815
    %v831 = vpack.c.bf16 %v818, %v817
    %v832 = vpack.c.bf16 %v820, %v819
    %v833 = vpack.c.bf16 %v822, %v821
    %v834 = vpack.c.bf16 %v824, %v823
    %v835 = vpack.c.bf16 %v826, %v825
    %v836 = vpack.c.bf16 %v828, %v827
    %v837 = vld [vmem:[%s3] sm:$0xff]
    %v838 = vld [vmem:[%s3 + $0x8] sm:$0xf]
    %v839 = vld [vmem:[%s3 + $0xc] sm:$0xff]
    %v840 = vld [vmem:[%s3 + $0x14] sm:$0xf]
    %v841 = vld [vmem:[%s3 + $0x18] sm:$0xff]
    %v842 = vld [vmem:[%s3 + $0x20] sm:$0xf]
    %v843 = vld [vmem:[%s3 + $0x24] sm:$0xff]
    %v844 = vld [vmem:[%s3 + $0x2c] sm:$0xf]
    %v845 = vld [vmem:[%s3 + $0x30] sm:$0xff]
    %v846 = vld [vmem:[%s3 + $0x38] sm:$0xf]
    %v847 = vld [vmem:[%s3 + $0x3c] sm:$0xff]
    %v848 = vld [vmem:[%s3 + $0x44] sm:$0xf]
    %v849 = vld [vmem:[%s3 + $0x48] sm:$0xff]
    %v850 = vld [vmem:[%s3 + $0x50] sm:$0xf]
    %v851 = vld [vmem:[%s3 + $0x54] sm:$0xff]
    %v852 = vld [vmem:[%s3 + $0x5c] sm:$0xf]
    %v853 = vld [vmem:[%s3 + $0x60] sm:$0xff]
    %v854 = vld [vmem:[%s3 + $0x68] sm:$0xf]
    %v855 = vld [vmem:[%s3 + $0x6c] sm:$0xff]
    %v856 = vld [vmem:[%s3 + $0x74] sm:$0xf]
    %v857 = vld [vmem:[%s3 + $0x78] sm:$0xff]
    %v858 = vld [vmem:[%s3 + $0x80] sm:$0xf]
    %v859 = vld [vmem:[%s3 + $0x84] sm:$0xff]
    %v860 = vld [vmem:[%s3 + $0x8c] sm:$0xf]
    %v861 = vld [vmem:[%s3 + $0x90] sm:$0xff]
    %v862 = vld [vmem:[%s3 + $0x98] sm:$0xf]
    %v863 = vld [vmem:[%s3 + $0x9c] sm:$0xff]
    %v864 = vld [vmem:[%s3 + $0xa4] sm:$0xf]
    %v865 = vld [vmem:[%s3 + $0xa8] sm:$0xff]
    %v866 = vld [vmem:[%s3 + $0xb0] sm:$0xf]
    %v867 = vld [vmem:[%s3 + $0xb4] sm:$0xff]
    %v868 = vld [vmem:[%s3 + $0xbc] sm:$0xf]
    %v901 = vunpack.c.l.b16 %v837
    %v902 = vunpack.c.h.b16 %v837
    %v903 = vunpack.c.l.b16 %v838
    %v904 = vunpack.c.l.b16 %v839
    %v905 = vunpack.c.h.b16 %v839
    %v906 = vunpack.c.l.b16 %v840
    %v907 = vunpack.c.l.b16 %v841
    %v908 = vunpack.c.h.b16 %v841
    %v909 = vunpack.c.l.b16 %v842
    %v910 = vunpack.c.l.b16 %v843
    %v911 = vunpack.c.h.b16 %v843
    %v912 = vunpack.c.l.b16 %v844
    %v913 = vunpack.c.l.b16 %v845
    %v914 = vunpack.c.h.b16 %v845
    %v915 = vunpack.c.l.b16 %v846
    %v916 = vunpack.c.l.b16 %v847
    %v917 = vunpack.c.h.b16 %v847
    %v918 = vunpack.c.l.b16 %v848
    %v919 = vunpack.c.l.b16 %v849
    %v920 = vunpack.c.h.b16 %v849
    %v921 = vunpack.c.l.b16 %v850
    %v922 = vunpack.c.l.b16 %v851
    %v923 = vunpack.c.h.b16 %v851
    %v924 = vunpack.c.l.b16 %v852
    %v925 = vunpack.c.l.b16 %v853
    %v926 = vunpack.c.h.b16 %v853
    %v927 = vunpack.c.l.b16 %v854
    %v928 = vunpack.c.l.b16 %v855
    %v929 = vunpack.c.h.b16 %v855
    %v930 = vunpack.c.l.b16 %v856
    %v931 = vunpack.c.l.b16 %v857
    %v932 = vunpack.c.h.b16 %v857
    %v933 = vunpack.c.l.b16 %v858
    %v934 = vunpack.c.l.b16 %v859
    %v935 = vunpack.c.h.b16 %v859
    %v936 = vunpack.c.l.b16 %v860
    %v937 = vunpack.c.l.b16 %v861
    %v938 = vunpack.c.h.b16 %v861
    %v939 = vunpack.c.l.b16 %v862
    %v940 = vunpack.c.l.b16 %v863
    %v941 = vunpack.c.h.b16 %v863
    %v942 = vunpack.c.l.b16 %v864
    %v943 = vunpack.c.l.b16 %v865
    %v944 = vunpack.c.h.b16 %v865
    %v945 = vunpack.c.l.b16 %v866
    %v946 = vunpack.c.l.b16 %v867
    %v947 = vunpack.c.h.b16 %v867
    %v948 = vunpack.c.l.b16 %v868
    %v949 = vpack.c.b16 %v904, %v901
    %v950 = vpack.c.b16 %v905, %v902
    %v951 = vpack.c.b16 %v906, %v903
    %v952 = vpack.c.b16 %v910, %v907
    %v953 = vpack.c.b16 %v911, %v908
    %v954 = vpack.c.b16 %v912, %v909
    %v955 = vpack.c.b16 %v916, %v913
    %v956 = vpack.c.b16 %v917, %v914
    %v957 = vpack.c.b16 %v918, %v915
    %v958 = vpack.c.b16 %v922, %v919
    %v959 = vpack.c.b16 %v923, %v920
    %v960 = vpack.c.b16 %v924, %v921
    %v961 = vpack.c.b16 %v928, %v925
    %v962 = vpack.c.b16 %v929, %v926
    %v963 = vpack.c.b16 %v930, %v927
    %v964 = vpack.c.b16 %v934, %v931
    %v965 = vpack.c.b16 %v935, %v932
    %v966 = vpack.c.b16 %v936, %v933
    %v967 = vpack.c.b16 %v940, %v937
    %v968 = vpack.c.b16 %v941, %v938
    %v969 = vpack.c.b16 %v942, %v939
    %v970 = vpack.c.b16 %v946, %v943
    %v971 = vpack.c.b16 %v947, %v944
    %v972 = vpack.c.b16 %v948, %v945
    %997 = vmatprep.subr.bf16.mxu0 %v950
    %998 = vmatpush1.bf16.msra.mxu0 %v949
    %999 = vmatprep.subr.bf16.mxu0 %v953
    %1000 = vmatpush1.bf16.msra.mxu0 %v952
    %1001 = vmatprep.subr.bf16.mxu0 %v956
    %1002 = vmatpush1.bf16.msra.mxu0 %v955
    %1003 = vmatprep.subr.bf16.mxu0 %v959
    %1004 = vmatpush1.bf16.msra.mxu0 %v958
    %1005 = vmatprep.subr.bf16.mxu0 %v962
    %1006 = vmatpush1.bf16.msra.mxu0 %v961
    %1007 = vmatprep.subr.bf16.mxu0 %v965
    %1008 = vmatpush1.bf16.msra.mxu0 %v964
    %1009 = vmatprep.subr.bf16.mxu0 %v968
    %1010 = vmatpush1.bf16.msra.mxu0 %v967
    %1011 = vmatprep.subr.bf16.mxu0 %v971
    %1012 = vmatpush1.bf16.msra.mxu0 %v970
    %1013 = vmatprep.subr.bf16.mxu0 0
    %1014 = vmatpush1.bf16.msra.mxu0 0
    %1015 = vmatprep.subr.bf16.mxu0 0
    %1016 = vmatpush1.bf16.msra.mxu0 0
    %1017 = vmatprep.subr.bf16.mxu0 0
    %1018 = vmatpush1.bf16.msra.mxu0 0
    %1019 = vmatprep.subr.bf16.mxu0 0
    %1020 = vmatpush1.bf16.msra.mxu0 0
    %1021 = vmatprep.subr.bf16.mxu0 0
    %1022 = vmatpush1.bf16.msra.mxu0 0
    %1023 = vmatprep.subr.bf16.mxu0 0
    %1024 = vmatpush1.bf16.msra.mxu0 0
    %1025 = vmatprep.subr.bf16.mxu0 0
    %1026 = vmatpush1.bf16.msra.mxu0 0
    %1027 = vmatprep.subr.bf16.mxu0 0
    %1028 = vmatpush1.bf16.msra.mxu0 0
    %1029 = vmatprep.mubr.bf16.mxu0 0
    %1030 = vmatmul.mubr.bf16.gmra.mrb[0].mxu0 %v829
    %v1031 = vpop.f32.mrb[0].mxu0
    %v1032 = vadd.f32 0.0, %v1031
    %v1033 = vpop.f32.mrb[0].mxu0
    %v1034 = vadd.f32 0.0, %v1033
    %v1035 = vpop.f32.mrb[0].mxu0
    %v1036 = vadd.f32 0.0, %v1035
    %v1037 = vpop.f32.mrb[0].mxu0
    %v1038 = vadd.f32 0.0, %v1037
    %1039 = vmatprep.mubr.bf16.mxu0 0
    %1040 = vmatmul.mubr.bf16.gmra.mrb[0].mxu0 %v830
    %v1041 = vpop.f32.mrb[0].mxu0
    %v1042 = vadd.f32 0.0, %v1041
    %v1043 = vpop.f32.mrb[0].mxu0
    %v1044 = vadd.f32 0.0, %v1043
    %v1045 = vpop.f32.mrb[0].mxu0
    %v1046 = vadd.f32 0.0, %v1045
    %v1047 = vpop.f32.mrb[0].mxu0
    %v1048 = vadd.f32 0.0, %v1047
    %1049 = vmatprep.mubr.bf16.mxu0 0
    %1050 = vmatmul.mubr.bf16.gmra.mrb[0].mxu0 %v831
    %v1051 = vpop.f32.mrb[0].mxu0
    %v1052 = vadd.f32 0.0, %v1051
    %v1053 = vpop.f32.mrb[0].mxu0
    %v1054 = vadd.f32 0.0, %v1053
    %v1055 = vpop.f32.mrb[0].mxu0
    %v1056 = vadd.f32 0.0, %v1055
    %v1057 = vpop.f32.mrb[0].mxu0
    %v1058 = vadd.f32 0.0, %v1057
    %1059 = vmatprep.mubr.bf16.mxu0 0
    %1060 = vmatmul.mubr.bf16.gmra.mrb[0].mxu0 %v832
    %v1061 = vpop.f32.mrb[0].mxu0
    %v1062 = vadd.f32 0.0, %v1061
    %v1063 = vpop.f32.mrb[0].mxu0
    %v1064 = vadd.f32 0.0, %v1063
    %v1065 = vpop.f32.mrb[0].mxu0
    %v1066 = vadd.f32 0.0, %v1065
    %v1067 = vpop.f32.mrb[0].mxu0
    %v1068 = vadd.f32 0.0, %v1067
    %1069 = vmatprep.mubr.bf16.mxu0 0
    %1070 = vmatmul.mubr.bf16.gmra.mrb[0].mxu0 %v833
    %v1071 = vpop.f32.mrb[0].mxu0
    %v1072 = vadd.f32 0.0, %v1071
    %v1073 = vpop.f32.mrb[0].mxu0
    %v1074 = vadd.f32 0.0, %v1073
    %v1075 = vpop.f32.mrb[0].mxu0
    %v1076 = vadd.f32 0.0, %v1075
    %v1077 = vpop.f32.mrb[0].mxu0
    %v1078 = vadd.f32 0.0, %v1077
    %1079 = vmatprep.mubr.bf16.mxu0 0
    %1080 = vmatmul.mubr.bf16.gmra.mrb[0].mxu0 %v834
    %v1081 = vpop.f32.mrb[0].mxu0
    %v1082 = vadd.f32 0.0, %v1081
    %v1083 = vpop.f32.mrb[0].mxu0
    %v1084 = vadd.f32 0.0, %v1083
    %v1085 = vpop.f32.mrb[0].mxu0
    %v1086 = vadd.f32 0.0, %v1085
    %v1087 = vpop.f32.mrb[0].mxu0
    %v1088 = vadd.f32 0.0, %v1087
    %1089 = vmatprep.mubr.bf16.mxu0 0
    %1090 = vmatmul.mubr.bf16.gmra.mrb[0].mxu0 %v835
    %v1091 = vpop.f32.mrb[0].mxu0
    %v1092 = vadd.f32 0.0, %v1091
    %v1093 = vpop.f32.mrb[0].mxu0
    %v1094 = vadd.f32 0.0, %v1093
    %v1095 = vpop.f32.mrb[0].mxu0
    %v1096 = vadd.f32 0.0, %v1095
    %v1097 = vpop.f32.mrb[0].mxu0
    %v1098 = vadd.f32 0.0, %v1097
    %1099 = vmatprep.mubr.bf16.mxu0 0
    %1100 = vmatmul.mubr.bf16.gmra.mrb[0].mxu0 %v836
    %v1101 = vpop.f32.mrb[0].mxu0
    %v1102 = vadd.f32 0.0, %v1101
    %v1103 = vpop.f32.mrb[0].mxu0
    %v1104 = vadd.f32 0.0, %v1103
    %v1105 = vpop.f32.mrb[0].mxu0
    %v1106 = vadd.f32 0.0, %v1105
    %v1107 = vpop.f32.mrb[0].mxu0
    %v1108 = vadd.f32 0.0, %v1107
    %1109 = vdwg.mxu0
    %1110 = vmatprep.subr.bf16.mxu0 0
    %1111 = vmatpush1.bf16.msra.mxu0 %v951
    %1112 = vmatprep.subr.bf16.mxu0 0
    %1113 = vmatpush1.bf16.msra.mxu0 %v954
    %1114 = vmatprep.subr.bf16.mxu0 0
    %1115 = vmatpush1.bf16.msra.mxu0 %v957
    %1116 = vmatprep.subr.bf16.mxu0 0
    %1117 = vmatpush1.bf16.msra.mxu0 %v960
    %1118 = vmatprep.subr.bf16.mxu0 0
    %1119 = vmatpush1.bf16.msra.mxu0 %v963
    %1120 = vmatprep.subr.bf16.mxu0 0
    %1121 = vmatpush1.bf16.msra.mxu0 %v966
    %1122 = vmatprep.subr.bf16.mxu0 0
    %1123 = vmatpush1.bf16.msra.mxu0 %v969
    %1124 = vmatprep.subr.bf16.mxu0 0
    %1125 = vmatpush1.bf16.msra.mxu0 %v972
    %1126 = vmatprep.subr.bf16.mxu0 0
    %1127 = vmatpush1.bf16.msra.mxu0 0
    %1128 = vmatprep.subr.bf16.mxu0 0
    %1129 = vmatpush1.bf16.msra.mxu0 0
    %1130 = vmatprep.subr.bf16.mxu0 0
    %1131 = vmatpush1.bf16.msra.mxu0 0
    %1132 = vmatprep.subr.bf16.mxu0 0
    %1133 = vmatpush1.bf16.msra.mxu0 0
    %1134 = vmatprep.subr.bf16.mxu0 0
    %1135 = vmatpush1.bf16.msra.mxu0 0
    %1136 = vmatprep.subr.bf16.mxu0 0
    %1137 = vmatpush1.bf16.msra.mxu0 0
    %1138 = vmatprep.subr.bf16.mxu0 0
    %1139 = vmatpush1.bf16.msra.mxu0 0
    %1140 = vmatprep.subr.bf16.mxu0 0
    %1141 = vmatpush1.bf16.msra.mxu0 0
    %1142 = vmatprep.mubr.bf16.mxu0 0
    %1143 = vmatmul.mubr.bf16.gmra.mrb[0].mxu0 %v829
    %v1144 = vpop.f32.mrb[0].mxu0
    %v1145 = vadd.f32 0.0, %v1144
    %v1146 = vpop.f32.mrb[0].mxu0
    %v1147 = vpop.f32.mrb[0].mxu0
    %v1148 = vadd.f32 0.0, %v1147
    %v1149 = vpop.f32.mrb[0].mxu0
    %1150 = vmatprep.mubr.bf16.mxu0 0
    %1151 = vmatmul.mubr.bf16.gmra.mrb[0].mxu0 %v830
    %v1152 = vpop.f32.mrb[0].mxu0
    %v1153 = vadd.f32 0.0, %v1152
    %v1154 = vpop.f32.mrb[0].mxu0
    %v1155 = vpop.f32.mrb[0].mxu0
    %v1156 = vadd.f32 0.0, %v1155
    %v1157 = vpop.f32.mrb[0].mxu0
    %1158 = vmatprep.mubr.bf16.mxu0 0
    %1159 = vmatmul.mubr.bf16.gmra.mrb[0].mxu0 %v831
    %v1160 = vpop.f32.mrb[0].mxu0
    %v1161 = vadd.f32 0.0, %v1160
    %v1162 = vpop.f32.mrb[0].mxu0
    %v1163 = vpop.f32.mrb[0].mxu0
    %v1164 = vadd.f32 0.0, %v1163
    %v1165 = vpop.f32.mrb[0].mxu0
    %1166 = vmatprep.mubr.bf16.mxu0 0
    %1167 = vmatmul.mubr.bf16.gmra.mrb[0].mxu0 %v832
    %v1168 = vpop.f32.mrb[0].mxu0
    %v1169 = vadd.f32 0.0, %v1168
    %v1170 = vpop.f32.mrb[0].mxu0
    %v1171 = vpop.f32.mrb[0].mxu0
    %v1172 = vadd.f32 0.0, %v1171
    %v1173 = vpop.f32.mrb[0].mxu0
    %1174 = vmatprep.mubr.bf16.mxu0 0
    %1175 = vmatmul.mubr.bf16.gmra.mrb[0].mxu0 %v833
    %v1176 = vpop.f32.mrb[0].mxu0
    %v1177 = vadd.f32 0.0, %v1176
    %v1178 = vpop.f32.mrb[0].mxu0
    %v1179 = vpop.f32.mrb[0].mxu0
    %v1180 = vadd.f32 0.0, %v1179
    %v1181 = vpop.f32.mrb[0].mxu0
    %1182 = vmatprep.mubr.bf16.mxu0 0
    %1183 = vmatmul.mubr.bf16.gmra.mrb[0].mxu0 %v834
    %v1184 = vpop.f32.mrb[0].mxu0
    %v1185 = vadd.f32 0.0, %v1184
    %v1186 = vpop.f32.mrb[0].mxu0
    %v1187 = vpop.f32.mrb[0].mxu0
    %v1188 = vadd.f32 0.0, %v1187
    %v1189 = vpop.f32.mrb[0].mxu0
    %1190 = vmatprep.mubr.bf16.mxu0 0
    %1191 = vmatmul.mubr.bf16.gmra.mrb[0].mxu0 %v835
    %v1192 = vpop.f32.mrb[0].mxu0
    %v1193 = vadd.f32 0.0, %v1192
    %v1194 = vpop.f32.mrb[0].mxu0
    %v1195 = vpop.f32.mrb[0].mxu0
    %v1196 = vadd.f32 0.0, %v1195
    %v1197 = vpop.f32.mrb[0].mxu0
    %1198 = vmatprep.mubr.bf16.mxu0 0
    %1199 = vmatmul.mubr.bf16.gmra.mrb[0].mxu0 %v836
    %v1200 = vpop.f32.mrb[0].mxu0
    %v1201 = vadd.f32 0.0, %v1200
    %v1202 = vpop.f32.mrb[0].mxu0
    %v1203 = vpop.f32.mrb[0].mxu0
    %v1204 = vadd.f32 0.0, %v1203
    %v1205 = vpop.f32.mrb[0].mxu0
    %1206 = vdwg.mxu0
    %v1207 = vrot.slane %v1032, 7
    %v1208 = vrot.slane %v1036, 7
    %v1209 = vrot.slane %v1042, 7
    %v1210 = vrot.slane %v1046, 7
    %v1211 = vrot.slane %v1052, 7
    %v1212 = vrot.slane %v1056, 7
    %v1213 = vrot.slane %v1062, 7
    %v1214 = vrot.slane %v1066, 7
    %v1215 = vrot.slane %v1072, 7
    %v1216 = vrot.slane %v1076, 7
    %v1217 = vrot.slane %v1082, 7
    %v1218 = vrot.slane %v1086, 7
    %v1219 = vrot.slane %v1092, 7
    %v1220 = vrot.slane %v1096, 7
    %v1221 = vrot.slane %v1102, 7
    %v1222 = vrot.slane %v1106, 7
    %v1223 = vsel %vm612, %v1221, %v1222
    %v1224 = vsel %vm612, %v1220, %v1221
    %v1225 = vsel %vm612, %v1219, %v1220
    %v1226 = vsel %vm612, %v1218, %v1219
    %v1227 = vsel %vm612, %v1217, %v1218
    %v1228 = vsel %vm612, %v1216, %v1217
    %v1229 = vsel %vm612, %v1215, %v1216
    %v1230 = vsel %vm612, %v1214, %v1215
    %v1231 = vsel %vm612, %v1213, %v1214
    %v1232 = vsel %vm612, %v1212, %v1213
    %v1233 = vsel %vm612, %v1211, %v1212
    %v1234 = vsel %vm612, %v1210, %v1211
    %v1235 = vsel %vm612, %v1209, %v1210
    %v1236 = vsel %vm612, %v1208, %v1209
    %v1237 = vsel %vm612, %v1207, %v1208
    %v1238 = vsel %vm612, %v1222, %v1207
    %v1239 = vsel %vm645, 0.0, %v1238
    %v1240 = vsel %vm646, 0.0, %v1237
    %v1241 = vsel %vm647, 0.0, %v1236
    %v1242 = vsel %vm648, 0.0, %v1235
    %v1243 = vsel %vm649, 0.0, %v1234
    %v1244 = vsel %vm650, 0.0, %v1233
    %v1245 = vsel %vm651, 0.0, %v1232
    %v1246 = vsel %vm652, 0.0, %v1231
    %v1247 = vsel %vm653, 0.0, %v1230
    %v1248 = vsel %vm654, 0.0, %v1229
    %v1249 = vsel %vm655, 0.0, %v1228
    %v1250 = vsel %vm656, 0.0, %v1227
    %v1251 = vsel %vm657, 0.0, %v1226
    %v1252 = vsel %vm658, 0.0, %v1225
    %v1253 = vsel %vm659, 0.0, %v1224
    %v1254 = vsel %vm660, 0.0, %v1223
    %v1255 = vrot.slane %v1145, 1
    %v1256 = vrot.slane %v1148, 1
    %v1257 = vrot.slane %v1153, 1
    %v1258 = vrot.slane %v1156, 1
    %v1259 = vrot.slane %v1161, 1
    %v1260 = vrot.slane %v1164, 1
    %v1261 = vrot.slane %v1169, 1
    %v1262 = vrot.slane %v1172, 1
    %v1263 = vrot.slane %v1177, 1
    %v1264 = vrot.slane %v1180, 1
    %v1265 = vrot.slane %v1185, 1
    %v1266 = vrot.slane %v1188, 1
    %v1267 = vrot.slane %v1193, 1
    %v1268 = vrot.slane %v1196, 1
    %v1269 = vrot.slane %v1201, 1
    %v1270 = vrot.slane %v1204, 1
    %v1271 = vsel %vm693, %v1269, %v1270
    %v1272 = vsel %vm693, %v1268, %v1269
    %v1273 = vsel %vm693, %v1267, %v1268
    %v1274 = vsel %vm693, %v1266, %v1267
    %v1275 = vsel %vm693, %v1265, %v1266
    %v1276 = vsel %vm693, %v1264, %v1265
    %v1277 = vsel %vm693, %v1263, %v1264
    %v1278 = vsel %vm693, %v1262, %v1263
    %v1279 = vsel %vm693, %v1261, %v1262
    %v1280 = vsel %vm693, %v1260, %v1261
    %v1281 = vsel %vm693, %v1259, %v1260
    %v1282 = vsel %vm693, %v1258, %v1259
    %v1283 = vsel %vm693, %v1257, %v1258
    %v1284 = vsel %vm693, %v1256, %v1257
    %v1285 = vsel %vm693, %v1255, %v1256
    %v1286 = vsel %vm693, %v1270, %v1255
    %v1287 = vsel %vm726, 0.0, %v1285
    %v1288 = vsel %vm727, 0.0, %v1284
    %v1289 = vsel %vm728, 0.0, %v1283
    %v1290 = vsel %vm729, 0.0, %v1282
    %v1291 = vsel %vm730, 0.0, %v1281
    %v1292 = vsel %vm731, 0.0, %v1280
    %v1293 = vsel %vm732, 0.0, %v1279
    %v1294 = vsel %vm733, 0.0, %v1278
    %v1295 = vsel %vm734, 0.0, %v1277
    %v1296 = vsel %vm735, 0.0, %v1276
    %v1297 = vsel %vm736, 0.0, %v1275
    %v1298 = vsel %vm737, 0.0, %v1274
    %v1299 = vsel %vm738, 0.0, %v1273
    %v1300 = vsel %vm739, 0.0, %v1272
    %v1301 = vsel %vm740, 0.0, %v1271
    %v1302 = vsel %vm741, 0.0, %v1286
    %v1303 = vadd.f32 %v1239, %v1034
    %v1304 = vadd.f32 %v1240, %v1038
    %v1305 = vadd.f32 %v1241, %v1044
    %v1306 = vadd.f32 %v1242, %v1048
    %v1307 = vadd.f32 %v1243, %v1054
    %v1308 = vadd.f32 %v1244, %v1058
    %v1309 = vadd.f32 %v1245, %v1064
    %v1310 = vadd.f32 %v1246, %v1068
    %v1311 = vadd.f32 %v1247, %v1074
    %v1312 = vadd.f32 %v1248, %v1078
    %v1313 = vadd.f32 %v1249, %v1084
    %v1314 = vadd.f32 %v1250, %v1088
    %v1315 = vadd.f32 %v1251, %v1094
    %v1316 = vadd.f32 %v1252, %v1098
    %v1317 = vadd.f32 %v1253, %v1104
    %v1318 = vadd.f32 %v1254, %v1108
    %v1319 = vadd.f32 %v1303, %v1287
    %v1320 = vadd.f32 %v1304, %v1288
    %v1321 = vadd.f32 %v1305, %v1289
    %v1322 = vadd.f32 %v1306, %v1290
    %v1323 = vadd.f32 %v1307, %v1291
    %v1324 = vadd.f32 %v1308, %v1292
    %v1325 = vadd.f32 %v1309, %v1293
    %v1326 = vadd.f32 %v1310, %v1294
    %v1327 = vadd.f32 %v1311, %v1295
    %v1328 = vadd.f32 %v1312, %v1296
    %v1329 = vadd.f32 %v1313, %v1297
    %v1330 = vadd.f32 %v1314, %v1298
    %v1331 = vadd.f32 %v1315, %v1299
    %v1332 = vadd.f32 %v1316, %v1300
    %v1333 = vadd.f32 %v1317, %v1301
    %v1334 = vadd.f32 %v1318, %v1302
    %v1335 = vld [vmem:[%s4] sm:$0x1]
    %v1337 = vlaneseq
    %v1338 = vshrl.u32 %v1337, 7
    %v1339 = vsub.s32 0, %v1338
    %v1340 = vrot.slane %v1335, %v1339
    %v1342 = vadd.f32 %v1319, %v1340
    %v1343 = vadd.f32 %v1320, %v1340
    %v1344 = vadd.f32 %v1321, %v1340
    %v1345 = vadd.f32 %v1322, %v1340
    %v1346 = vadd.f32 %v1323, %v1340
    %v1347 = vadd.f32 %v1324, %v1340
    %v1348 = vadd.f32 %v1325, %v1340
    %v1349 = vadd.f32 %v1326, %v1340
    %v1350 = vadd.f32 %v1327, %v1340
    %v1351 = vadd.f32 %v1328, %v1340
    %v1352 = vadd.f32 %v1329, %v1340
    %v1353 = vadd.f32 %v1330, %v1340
    %v1354 = vadd.f32 %v1331, %v1340
    %v1355 = vadd.f32 %v1332, %v1340
    %v1356 = vadd.f32 %v1333, %v1340
    %v1357 = vadd.f32 %v1334, %v1340
    %v1358 = vmax.f32 %v1342, 0.0
    %v1359 = vmax.f32 %v1343, 0.0
    %v1360 = vmax.f32 %v1344, 0.0
    %v1361 = vmax.f32 %v1345, 0.0
    %v1362 = vmax.f32 %v1346, 0.0
    %v1363 = vmax.f32 %v1347, 0.0
    %v1364 = vmax.f32 %v1348, 0.0
    %v1365 = vmax.f32 %v1349, 0.0
    %v1366 = vmax.f32 %v1350, 0.0
    %v1367 = vmax.f32 %v1351, 0.0
    %v1368 = vmax.f32 %v1352, 0.0
    %v1369 = vmax.f32 %v1353, 0.0
    %v1370 = vmax.f32 %v1354, 0.0
    %v1371 = vmax.f32 %v1355, 0.0
    %v1372 = vmax.f32 %v1356, 0.0
    %v1373 = vmax.f32 %v1357, 0.0
    %v1374 = vpack.c.bf16 %v1359, %v1358
    %v1375 = vpack.c.bf16 %v1361, %v1360
    %v1376 = vpack.c.bf16 %v1363, %v1362
    %v1377 = vpack.c.bf16 %v1365, %v1364
    %v1378 = vpack.c.bf16 %v1367, %v1366
    %v1379 = vpack.c.bf16 %v1369, %v1368
    %v1380 = vpack.c.bf16 %v1371, %v1370
    %v1381 = vpack.c.bf16 %v1373, %v1372
    %v1382 = vld [vmem:[%s5] sm:$0xff]
    %v1383 = vld [vmem:[%s5 + $0x8] sm:$0xf]
    %v1384 = vld [vmem:[%s5 + $0xc] sm:$0xff]
    %v1385 = vld [vmem:[%s5 + $0x14] sm:$0xf]
    %v1386 = vld [vmem:[%s5 + $0x18] sm:$0xff]
    %v1387 = vld [vmem:[%s5 + $0x20] sm:$0xf]
    %v1388 = vld [vmem:[%s5 + $0x24] sm:$0xff]
    %v1389 = vld [vmem:[%s5 + $0x2c] sm:$0xf]
    %v1390 = vld [vmem:[%s5 + $0x30] sm:$0xff]
    %v1391 = vld [vmem:[%s5 + $0x38] sm:$0xf]
    %v1392 = vld [vmem:[%s5 + $0x3c] sm:$0xff]
    %v1393 = vld [vmem:[%s5 + $0x44] sm:$0xf]
    %v1394 = vld [vmem:[%s5 + $0x48] sm:$0xff]
    %v1395 = vld [vmem:[%s5 + $0x50] sm:$0xf]
    %v1396 = vld [vmem:[%s5 + $0x54] sm:$0xff]
    %v1397 = vld [vmem:[%s5 + $0x5c] sm:$0xf]
    %v1398 = vld [vmem:[%s5 + $0x60] sm:$0xff]
    %v1399 = vld [vmem:[%s5 + $0x68] sm:$0xf]
    %v1400 = vld [vmem:[%s5 + $0x6c] sm:$0xff]
    %v1401 = vld [vmem:[%s5 + $0x74] sm:$0xf]
    %v1402 = vld [vmem:[%s5 + $0x78] sm:$0xff]
    %v1403 = vld [vmem:[%s5 + $0x80] sm:$0xf]
    %v1404 = vld [vmem:[%s5 + $0x84] sm:$0xff]
    %v1405 = vld [vmem:[%s5 + $0x8c] sm:$0xf]
    %v1406 = vld [vmem:[%s5 + $0x90] sm:$0xff]
    %v1407 = vld [vmem:[%s5 + $0x98] sm:$0xf]
    %v1408 = vld [vmem:[%s5 + $0x9c] sm:$0xff]
    %v1409 = vld [vmem:[%s5 + $0xa4] sm:$0xf]
    %v1410 = vld [vmem:[%s5 + $0xa8] sm:$0xff]
    %v1411 = vld [vmem:[%s5 + $0xb0] sm:$0xf]
    %v1412 = vld [vmem:[%s5 + $0xb4] sm:$0xff]
    %v1413 = vld [vmem:[%s5 + $0xbc] sm:$0xf]
    %v1446 = vunpack.c.l.b16 %v1382
    %v1447 = vunpack.c.h.b16 %v1382
    %v1448 = vunpack.c.l.b16 %v1383
    %v1449 = vunpack.c.l.b16 %v1384
    %v1450 = vunpack.c.h.b16 %v1384
    %v1451 = vunpack.c.l.b16 %v1385
    %v1452 = vunpack.c.l.b16 %v1386
    %v1453 = vunpack.c.h.b16 %v1386
    %v1454 = vunpack.c.l.b16 %v1387
    %v1455 = vunpack.c.l.b16 %v1388
    %v1456 = vunpack.c.h.b16 %v1388
    %v1457 = vunpack.c.l.b16 %v1389
    %v1458 = vunpack.c.l.b16 %v1390
    %v1459 = vunpack.c.h.b16 %v1390
    %v1460 = vunpack.c.l.b16 %v1391
    %v1461 = vunpack.c.l.b16 %v1392
    %v1462 = vunpack.c.h.b16 %v1392
    %v1463 = vunpack.c.l.b16 %v1393
    %v1464 = vunpack.c.l.b16 %v1394
    %v1465 = vunpack.c.h.b16 %v1394
    %v1466 = vunpack.c.l.b16 %v1395
    %v1467 = vunpack.c.l.b16 %v1396
    %v1468 = vunpack.c.h.b16 %v1396
    %v1469 = vunpack.c.l.b16 %v1397
    %v1470 = vunpack.c.l.b16 %v1398
    %v1471 = vunpack.c.h.b16 %v1398
    %v1472 = vunpack.c.l.b16 %v1399
    %v1473 = vunpack.c.l.b16 %v1400
    %v1474 = vunpack.c.h.b16 %v1400
    %v1475 = vunpack.c.l.b16 %v1401
    %v1476 = vunpack.c.l.b16 %v1402
    %v1477 = vunpack.c.h.b16 %v1402
    %v1478 = vunpack.c.l.b16 %v1403
    %v1479 = vunpack.c.l.b16 %v1404
    %v1480 = vunpack.c.h.b16 %v1404
    %v1481 = vunpack.c.l.b16 %v1405
    %v1482 = vunpack.c.l.b16 %v1406
    %v1483 = vunpack.c.h.b16 %v1406
    %v1484 = vunpack.c.l.b16 %v1407
    %v1485 = vunpack.c.l.b16 %v1408
    %v1486 = vunpack.c.h.b16 %v1408
    %v1487 = vunpack.c.l.b16 %v1409
    %v1488 = vunpack.c.l.b16 %v1410
    %v1489 = vunpack.c.h.b16 %v1410
    %v1490 = vunpack.c.l.b16 %v1411
    %v1491 = vunpack.c.l.b16 %v1412
    %v1492 = vunpack.c.h.b16 %v1412
    %v1493 = vunpack.c.l.b16 %v1413
    %v1494 = vpack.c.b16 %v1449, %v1446
    %v1495 = vpack.c.b16 %v1450, %v1447
    %v1496 = vpack.c.b16 %v1451, %v1448
    %v1497 = vpack.c.b16 %v1455, %v1452
    %v1498 = vpack.c.b16 %v1456, %v1453
    %v1499 = vpack.c.b16 %v1457, %v1454
    %v1500 = vpack.c.b16 %v1461, %v1458
    %v1501 = vpack.c.b16 %v1462, %v1459
    %v1502 = vpack.c.b16 %v1463, %v1460
    %v1503 = vpack.c.b16 %v1467, %v1464
    %v1504 = vpack.c.b16 %v1468, %v1465
    %v1505 = vpack.c.b16 %v1469, %v1466
    %v1506 = vpack.c.b16 %v1473, %v1470
    %v1507 = vpack.c.b16 %v1474, %v1471
    %v1508 = vpack.c.b16 %v1475, %v1472
    %v1509 = vpack.c.b16 %v1479, %v1476
    %v1510 = vpack.c.b16 %v1480, %v1477
    %v1511 = vpack.c.b16 %v1481, %v1478
    %v1512 = vpack.c.b16 %v1485, %v1482
    %v1513 = vpack.c.b16 %v1486, %v1483
    %v1514 = vpack.c.b16 %v1487, %v1484
    %v1515 = vpack.c.b16 %v1491, %v1488
    %v1516 = vpack.c.b16 %v1492, %v1489
    %v1517 = vpack.c.b16 %v1493, %v1490
    %1542 = vmatprep.subr.bf16.mxu0 %v1495
    %1543 = vmatpush1.bf16.msra.mxu0 %v1494
    %1544 = vmatprep.subr.bf16.mxu0 %v1498
    %1545 = vmatpush1.bf16.msra.mxu0 %v1497
    %1546 = vmatprep.subr.bf16.mxu0 %v1501
    %1547 = vmatpush1.bf16.msra.mxu0 %v1500
    %1548 = vmatprep.subr.bf16.mxu0 %v1504
    %1549 = vmatpush1.bf16.msra.mxu0 %v1503
    %1550 = vmatprep.subr.bf16.mxu0 %v1507
    %1551 = vmatpush1.bf16.msra.mxu0 %v1506
    %1552 = vmatprep.subr.bf16.mxu0 %v1510
    %1553 = vmatpush1.bf16.msra.mxu0 %v1509
    %1554 = vmatprep.subr.bf16.mxu0 %v1513
    %1555 = vmatpush1.bf16.msra.mxu0 %v1512
    %1556 = vmatprep.subr.bf16.mxu0 %v1516
    %1557 = vmatpush1.bf16.msra.mxu0 %v1515
    %1558 = vmatprep.subr.bf16.mxu0 0
    %1559 = vmatpush1.bf16.msra.mxu0 0
    %1560 = vmatprep.subr.bf16.mxu0 0
    %1561 = vmatpush1.bf16.msra.mxu0 0
    %1562 = vmatprep.subr.bf16.mxu0 0
    %1563 = vmatpush1.bf16.msra.mxu0 0
    %1564 = vmatprep.subr.bf16.mxu0 0
    %1565 = vmatpush1.bf16.msra.mxu0 0
    %1566 = vmatprep.subr.bf16.mxu0 0
    %1567 = vmatpush1.bf16.msra.mxu0 0
    %1568 = vmatprep.subr.bf16.mxu0 0
    %1569 = vmatpush1.bf16.msra.mxu0 0
    %1570 = vmatprep.subr.bf16.mxu0 0
    %1571 = vmatpush1.bf16.msra.mxu0 0
    %1572 = vmatprep.subr.bf16.mxu0 0
    %1573 = vmatpush1.bf16.msra.mxu0 0
    %1574 = vmatprep.mubr.bf16.mxu0 0
    %1575 = vmatmul.mubr.bf16.gmra.mrb[0].mxu0 %v1374
    %v1576 = vpop.f32.mrb[0].mxu0
    %v1577 = vadd.f32 0.0, %v1576
    %v1578 = vpop.f32.mrb[0].mxu0
    %v1579 = vadd.f32 0.0, %v1578
    %v1580 = vpop.f32.mrb[0].mxu0
    %v1581 = vadd.f32 0.0, %v1580
    %v1582 = vpop.f32.mrb[0].mxu0
    %v1583 = vadd.f32 0.0, %v1582
    %1584 = vmatprep.mubr.bf16.mxu0 0
    %1585 = vmatmul.mubr.bf16.gmra.mrb[0].mxu0 %v1375
    %v1586 = vpop.f32.mrb[0].mxu0
    %v1587 = vadd.f32 0.0, %v1586
    %v1588 = vpop.f32.mrb[0].mxu0
    %v1589 = vadd.f32 0.0, %v1588
    %v1590 = vpop.f32.mrb[0].mxu0
    %v1591 = vadd.f32 0.0, %v1590
    %v1592 = vpop.f32.mrb[0].mxu0
    %v1593 = vadd.f32 0.0, %v1592
    %1594 = vmatprep.mubr.bf16.mxu0 0
    %1595 = vmatmul.mubr.bf16.gmra.mrb[0].mxu0 %v1376
    %v1596 = vpop.f32.mrb[0].mxu0
    %v1597 = vadd.f32 0.0, %v1596
    %v1598 = vpop.f32.mrb[0].mxu0
    %v1599 = vadd.f32 0.0, %v1598
    %v1600 = vpop.f32.mrb[0].mxu0
    %v1601 = vadd.f32 0.0, %v1600
    %v1602 = vpop.f32.mrb[0].mxu0
    %v1603 = vadd.f32 0.0, %v1602
    %1604 = vmatprep.mubr.bf16.mxu0 0
    %1605 = vmatmul.mubr.bf16.gmra.mrb[0].mxu0 %v1377
    %v1606 = vpop.f32.mrb[0].mxu0
    %v1607 = vadd.f32 0.0, %v1606
    %v1608 = vpop.f32.mrb[0].mxu0
    %v1609 = vadd.f32 0.0, %v1608
    %v1610 = vpop.f32.mrb[0].mxu0
    %v1611 = vadd.f32 0.0, %v1610
    %v1612 = vpop.f32.mrb[0].mxu0
    %v1613 = vadd.f32 0.0, %v1612
    %1614 = vmatprep.mubr.bf16.mxu0 0
    %1615 = vmatmul.mubr.bf16.gmra.mrb[0].mxu0 %v1378
    %v1616 = vpop.f32.mrb[0].mxu0
    %v1617 = vadd.f32 0.0, %v1616
    %v1618 = vpop.f32.mrb[0].mxu0
    %v1619 = vadd.f32 0.0, %v1618
    %v1620 = vpop.f32.mrb[0].mxu0
    %v1621 = vadd.f32 0.0, %v1620
    %v1622 = vpop.f32.mrb[0].mxu0
    %v1623 = vadd.f32 0.0, %v1622
    %1624 = vmatprep.mubr.bf16.mxu0 0
    %1625 = vmatmul.mubr.bf16.gmra.mrb[0].mxu0 %v1379
    %v1626 = vpop.f32.mrb[0].mxu0
    %v1627 = vadd.f32 0.0, %v1626
    %v1628 = vpop.f32.mrb[0].mxu0
    %v1629 = vadd.f32 0.0, %v1628
    %v1630 = vpop.f32.mrb[0].mxu0
    %v1631 = vadd.f32 0.0, %v1630
    %v1632 = vpop.f32.mrb[0].mxu0
    %v1633 = vadd.f32 0.0, %v1632
    %1634 = vmatprep.mubr.bf16.mxu0 0
    %1635 = vmatmul.mubr.bf16.gmra.mrb[0].mxu0 %v1380
    %v1636 = vpop.f32.mrb[0].mxu0
    %v1637 = vadd.f32 0.0, %v1636
    %v1638 = vpop.f32.mrb[0].mxu0
    %v1639 = vadd.f32 0.0, %v1638
    %v1640 = vpop.f32.mrb[0].mxu0
    %v1641 = vadd.f32 0.0, %v1640
    %v1642 = vpop.f32.mrb[0].mxu0
    %v1643 = vadd.f32 0.0, %v1642
    %1644 = vmatprep.mubr.bf16.mxu0 0
    %1645 = vmatmul.mubr.bf16.gmra.mrb[0].mxu0 %v1381
    %v1646 = vpop.f32.mrb[0].mxu0
    %v1647 = vadd.f32 0.0, %v1646
    %v1648 = vpop.f32.mrb[0].mxu0
    %v1649 = vadd.f32 0.0, %v1648
    %v1650 = vpop.f32.mrb[0].mxu0
    %v1651 = vadd.f32 0.0, %v1650
    %v1652 = vpop.f32.mrb[0].mxu0
    %v1653 = vadd.f32 0.0, %v1652
    %1654 = vdwg.mxu0
    %1655 = vmatprep.subr.bf16.mxu0 0
    %1656 = vmatpush1.bf16.msra.mxu0 %v1496
    %1657 = vmatprep.subr.bf16.mxu0 0
    %1658 = vmatpush1.bf16.msra.mxu0 %v1499
    %1659 = vmatprep.subr.bf16.mxu0 0
    %1660 = vmatpush1.bf16.msra.mxu0 %v1502
    %1661 = vmatprep.subr.bf16.mxu0 0
    %1662 = vmatpush1.bf16.msra.mxu0 %v1505
    %1663 = vmatprep.subr.bf16.mxu0 0
    %1664 = vmatpush1.bf16.msra.mxu0 %v1508
    %1665 = vmatprep.subr.bf16.mxu0 0
    %1666 = vmatpush1.bf16.msra.mxu0 %v1511
    %1667 = vmatprep.subr.bf16.mxu0 0
    %1668 = vmatpush1.bf16.msra.mxu0 %v1514
    %1669 = vmatprep.subr.bf16.mxu0 0
    %1670 = vmatpush1.bf16.msra.mxu0 %v1517
    %1671 = vmatprep.subr.bf16.mxu0 0
    %1672 = vmatpush1.bf16.msra.mxu0 0
    %1673 = vmatprep.subr.bf16.mxu0 0
    %1674 = vmatpush1.bf16.msra.mxu0 0
    %1675 = vmatprep.subr.bf16.mxu0 0
    %1676 = vmatpush1.bf16.msra.mxu0 0
    %1677 = vmatprep.subr.bf16.mxu0 0
    %1678 = vmatpush1.bf16.msra.mxu0 0
    %1679 = vmatprep.subr.bf16.mxu0 0
    %1680 = vmatpush1.bf16.msra.mxu0 0
    %1681 = vmatprep.subr.bf16.mxu0 0
    %1682 = vmatpush1.bf16.msra.mxu0 0
    %1683 = vmatprep.subr.bf16.mxu0 0
    %1684 = vmatpush1.bf16.msra.mxu0 0
    %1685 = vmatprep.subr.bf16.mxu0 0
    %1686 = vmatpush1.bf16.msra.mxu0 0
    %1687 = vmatprep.mubr.bf16.mxu0 0
    %1688 = vmatmul.mubr.bf16.gmra.mrb[0].mxu0 %v1374
    %v1689 = vpop.f32.mrb[0].mxu0
    %v1690 = vadd.f32 0.0, %v1689
    %v1691 = vpop.f32.mrb[0].mxu0
    %v1692 = vpop.f32.mrb[0].mxu0
    %v1693 = vadd.f32 0.0, %v1692
    %v1694 = vpop.f32.mrb[0].mxu0
    %1695 = vmatprep.mubr.bf16.mxu0 0
    %1696 = vmatmul.mubr.bf16.gmra.mrb[0].mxu0 %v1375
    %v1697 = vpop.f32.mrb[0].mxu0
    %v1698 = vadd.f32 0.0, %v1697
    %v1699 = vpop.f32.mrb[0].mxu0
    %v1700 = vpop.f32.mrb[0].mxu0
    %v1701 = vadd.f32 0.0, %v1700
    %v1702 = vpop.f32.mrb[0].mxu0
    %1703 = vmatprep.mubr.bf16.mxu0 0
    %1704 = vmatmul.mubr.bf16.gmra.mrb[0].mxu0 %v1376
    %v1705 = vpop.f32.mrb[0].mxu0
    %v1706 = vadd.f32 0.0, %v1705
    %v1707 = vpop.f32.mrb[0].mxu0
    %v1708 = vpop.f32.mrb[0].mxu0
    %v1709 = vadd.f32 0.0, %v1708
    %v1710 = vpop.f32.mrb[0].mxu0
    %1711 = vmatprep.mubr.bf16.mxu0 0
    %1712 = vmatmul.mubr.bf16.gmra.mrb[0].mxu0 %v1377
    %v1713 = vpop.f32.mrb[0].mxu0
    %v1714 = vadd.f32 0.0, %v1713
    %v1715 = vpop.f32.mrb[0].mxu0
    %v1716 = vpop.f32.mrb[0].mxu0
    %v1717 = vadd.f32 0.0, %v1716
    %v1718 = vpop.f32.mrb[0].mxu0
    %1719 = vmatprep.mubr.bf16.mxu0 0
    %1720 = vmatmul.mubr.bf16.gmra.mrb[0].mxu0 %v1378
    %v1721 = vpop.f32.mrb[0].mxu0
    %v1722 = vadd.f32 0.0, %v1721
    %v1723 = vpop.f32.mrb[0].mxu0
    %v1724 = vpop.f32.mrb[0].mxu0
    %v1725 = vadd.f32 0.0, %v1724
    %v1726 = vpop.f32.mrb[0].mxu0
    %1727 = vmatprep.mubr.bf16.mxu0 0
    %1728 = vmatmul.mubr.bf16.gmra.mrb[0].mxu0 %v1379
    %v1729 = vpop.f32.mrb[0].mxu0
    %v1730 = vadd.f32 0.0, %v1729
    %v1731 = vpop.f32.mrb[0].mxu0
    %v1732 = vpop.f32.mrb[0].mxu0
    %v1733 = vadd.f32 0.0, %v1732
    %v1734 = vpop.f32.mrb[0].mxu0
    %1735 = vmatprep.mubr.bf16.mxu0 0
    %1736 = vmatmul.mubr.bf16.gmra.mrb[0].mxu0 %v1380
    %v1737 = vpop.f32.mrb[0].mxu0
    %v1738 = vadd.f32 0.0, %v1737
    %v1739 = vpop.f32.mrb[0].mxu0
    %v1740 = vpop.f32.mrb[0].mxu0
    %v1741 = vadd.f32 0.0, %v1740
    %v1742 = vpop.f32.mrb[0].mxu0
    %1743 = vmatprep.mubr.bf16.mxu0 0
    %1744 = vmatmul.mubr.bf16.gmra.mrb[0].mxu0 %v1381
    %v1745 = vpop.f32.mrb[0].mxu0
    %v1746 = vadd.f32 0.0, %v1745
    %v1747 = vpop.f32.mrb[0].mxu0
    %v1748 = vpop.f32.mrb[0].mxu0
    %v1749 = vadd.f32 0.0, %v1748
    %v1750 = vpop.f32.mrb[0].mxu0
    %1751 = vdwg.mxu0
    %v1752 = vrot.slane %v1577, 7
    %v1753 = vrot.slane %v1581, 7
    %v1754 = vrot.slane %v1587, 7
    %v1755 = vrot.slane %v1591, 7
    %v1756 = vrot.slane %v1597, 7
    %v1757 = vrot.slane %v1601, 7
    %v1758 = vrot.slane %v1607, 7
    %v1759 = vrot.slane %v1611, 7
    %v1760 = vrot.slane %v1617, 7
    %v1761 = vrot.slane %v1621, 7
    %v1762 = vrot.slane %v1627, 7
    %v1763 = vrot.slane %v1631, 7
    %v1764 = vrot.slane %v1637, 7
    %v1765 = vrot.slane %v1641, 7
    %v1766 = vrot.slane %v1647, 7
    %v1767 = vrot.slane %v1651, 7
    %v1768 = vsel %vm612, %v1766, %v1767
    %v1769 = vsel %vm612, %v1765, %v1766
    %v1770 = vsel %vm612, %v1764, %v1765
    %v1771 = vsel %vm612, %v1763, %v1764
    %v1772 = vsel %vm612, %v1762, %v1763
    %v1773 = vsel %vm612, %v1761, %v1762
    %v1774 = vsel %vm612, %v1760, %v1761
    %v1775 = vsel %vm612, %v1759, %v1760
    %v1776 = vsel %vm612, %v1758, %v1759
    %v1777 = vsel %vm612, %v1757, %v1758
    %v1778 = vsel %vm612, %v1756, %v1757
    %v1779 = vsel %vm612, %v1755, %v1756
    %v1780 = vsel %vm612, %v1754, %v1755
    %v1781 = vsel %vm612, %v1753, %v1754
    %v1782 = vsel %vm612, %v1752, %v1753
    %v1783 = vsel %vm612, %v1767, %v1752
    %v1784 = vsel %vm645, 0.0, %v1783
    %v1785 = vsel %vm646, 0.0, %v1782
    %v1786 = vsel %vm647, 0.0, %v1781
    %v1787 = vsel %vm648, 0.0, %v1780
    %v1788 = vsel %vm649, 0.0, %v1779
    %v1789 = vsel %vm650, 0.0, %v1778
    %v1790 = vsel %vm651, 0.0, %v1777
    %v1791 = vsel %vm652, 0.0, %v1776
    %v1792 = vsel %vm653, 0.0, %v1775
    %v1793 = vsel %vm654, 0.0, %v1774
    %v1794 = vsel %vm655, 0.0, %v1773
    %v1795 = vsel %vm656, 0.0, %v1772
    %v1796 = vsel %vm657, 0.0, %v1771
    %v1797 = vsel %vm658, 0.0, %v1770
    %v1798 = vsel %vm659, 0.0, %v1769
    %v1799 = vsel %vm660, 0.0, %v1768
    %v1800 = vrot.slane %v1690, 1
    %v1801 = vrot.slane %v1693, 1
    %v1802 = vrot.slane %v1698, 1
    %v1803 = vrot.slane %v1701, 1
    %v1804 = vrot.slane %v1706, 1
    %v1805 = vrot.slane %v1709, 1
    %v1806 = vrot.slane %v1714, 1
    %v1807 = vrot.slane %v1717, 1
    %v1808 = vrot.slane %v1722, 1
    %v1809 = vrot.slane %v1725, 1
    %v1810 = vrot.slane %v1730, 1
    %v1811 = vrot.slane %v1733, 1
    %v1812 = vrot.slane %v1738, 1
    %v1813 = vrot.slane %v1741, 1
    %v1814 = vrot.slane %v1746, 1
    %v1815 = vrot.slane %v1749, 1
    %v1816 = vsel %vm693, %v1814, %v1815
    %v1817 = vsel %vm693, %v1813, %v1814
    %v1818 = vsel %vm693, %v1812, %v1813
    %v1819 = vsel %vm693, %v1811, %v1812
    %v1820 = vsel %vm693, %v1810, %v1811
    %v1821 = vsel %vm693, %v1809, %v1810
    %v1822 = vsel %vm693, %v1808, %v1809
    %v1823 = vsel %vm693, %v1807, %v1808
    %v1824 = vsel %vm693, %v1806, %v1807
    %v1825 = vsel %vm693, %v1805, %v1806
    %v1826 = vsel %vm693, %v1804, %v1805
    %v1827 = vsel %vm693, %v1803, %v1804
    %v1828 = vsel %vm693, %v1802, %v1803
    %v1829 = vsel %vm693, %v1801, %v1802
    %v1830 = vsel %vm693, %v1800, %v1801
    %v1831 = vsel %vm693, %v1815, %v1800
    %v1832 = vsel %vm726, 0.0, %v1830
    %v1833 = vsel %vm727, 0.0, %v1829
    %v1834 = vsel %vm728, 0.0, %v1828
    %v1835 = vsel %vm729, 0.0, %v1827
    %v1836 = vsel %vm730, 0.0, %v1826
    %v1837 = vsel %vm731, 0.0, %v1825
    %v1838 = vsel %vm732, 0.0, %v1824
    %v1839 = vsel %vm733, 0.0, %v1823
    %v1840 = vsel %vm734, 0.0, %v1822
    %v1841 = vsel %vm735, 0.0, %v1821
    %v1842 = vsel %vm736, 0.0, %v1820
    %v1843 = vsel %vm737, 0.0, %v1819
    %v1844 = vsel %vm738, 0.0, %v1818
    %v1845 = vsel %vm739, 0.0, %v1817
    %v1846 = vsel %vm740, 0.0, %v1816
    %v1847 = vsel %vm741, 0.0, %v1831
    %v1848 = vadd.f32 %v1784, %v1579
    %v1849 = vadd.f32 %v1785, %v1583
    %v1850 = vadd.f32 %v1786, %v1589
    %v1851 = vadd.f32 %v1787, %v1593
    %v1852 = vadd.f32 %v1788, %v1599
    %v1853 = vadd.f32 %v1789, %v1603
    %v1854 = vadd.f32 %v1790, %v1609
    %v1855 = vadd.f32 %v1791, %v1613
    %v1856 = vadd.f32 %v1792, %v1619
    %v1857 = vadd.f32 %v1793, %v1623
    %v1858 = vadd.f32 %v1794, %v1629
    %v1859 = vadd.f32 %v1795, %v1633
    %v1860 = vadd.f32 %v1796, %v1639
    %v1861 = vadd.f32 %v1797, %v1643
    %v1862 = vadd.f32 %v1798, %v1649
    %v1863 = vadd.f32 %v1799, %v1653
    %v1864 = vadd.f32 %v1848, %v1832
    %v1865 = vadd.f32 %v1849, %v1833
    %v1866 = vadd.f32 %v1850, %v1834
    %v1867 = vadd.f32 %v1851, %v1835
    %v1868 = vadd.f32 %v1852, %v1836
    %v1869 = vadd.f32 %v1853, %v1837
    %v1870 = vadd.f32 %v1854, %v1838
    %v1871 = vadd.f32 %v1855, %v1839
    %v1872 = vadd.f32 %v1856, %v1840
    %v1873 = vadd.f32 %v1857, %v1841
    %v1874 = vadd.f32 %v1858, %v1842
    %v1875 = vadd.f32 %v1859, %v1843
    %v1876 = vadd.f32 %v1860, %v1844
    %v1877 = vadd.f32 %v1861, %v1845
    %v1878 = vadd.f32 %v1862, %v1846
    %v1879 = vadd.f32 %v1863, %v1847
    %v1880 = vld [vmem:[%s6] sm:$0x1]
    %v1882 = vlaneseq
    %v1883 = vshrl.u32 %v1882, 7
    %v1884 = vsub.s32 0, %v1883
    %v1885 = vrot.slane %v1880, %v1884
    %v1887 = vadd.f32 %v1864, %v1885
    %v1888 = vadd.f32 %v1865, %v1885
    %v1889 = vadd.f32 %v1866, %v1885
    %v1890 = vadd.f32 %v1867, %v1885
    %v1891 = vadd.f32 %v1868, %v1885
    %v1892 = vadd.f32 %v1869, %v1885
    %v1893 = vadd.f32 %v1870, %v1885
    %v1894 = vadd.f32 %v1871, %v1885
    %v1895 = vadd.f32 %v1872, %v1885
    %v1896 = vadd.f32 %v1873, %v1885
    %v1897 = vadd.f32 %v1874, %v1885
    %v1898 = vadd.f32 %v1875, %v1885
    %v1899 = vadd.f32 %v1876, %v1885
    %v1900 = vadd.f32 %v1877, %v1885
    %v1901 = vadd.f32 %v1878, %v1885
    %v1902 = vadd.f32 %v1879, %v1885
    %v1903 = vmax.f32 %v1887, 0.0
    %v1904 = vmax.f32 %v1888, 0.0
    %v1905 = vmax.f32 %v1889, 0.0
    %v1906 = vmax.f32 %v1890, 0.0
    %v1907 = vmax.f32 %v1891, 0.0
    %v1908 = vmax.f32 %v1892, 0.0
    %v1909 = vmax.f32 %v1893, 0.0
    %v1910 = vmax.f32 %v1894, 0.0
    %v1911 = vmax.f32 %v1895, 0.0
    %v1912 = vmax.f32 %v1896, 0.0
    %v1913 = vmax.f32 %v1897, 0.0
    %v1914 = vmax.f32 %v1898, 0.0
    %v1915 = vmax.f32 %v1899, 0.0
    %v1916 = vmax.f32 %v1900, 0.0
    %v1917 = vmax.f32 %v1901, 0.0
    %v1918 = vmax.f32 %v1902, 0.0
    %v1919 = vadd.f32 %v1903, %v1904
    %v1920 = vrot.slane %v1919, 4
    %v1921 = vadd.f32 %v1919, %v1920
    %v1922 = vrot.slane %v1921, 2
    %v1923 = vadd.f32 %v1921, %v1922
    %v1924 = vrot.slane %v1923, 1
    %v1925 = vadd.f32 %v1923, %v1924
    %v1926 = vadd.f32 %v1905, %v1906
    %v1927 = vrot.slane %v1926, 4
    %v1928 = vadd.f32 %v1926, %v1927
    %v1929 = vrot.slane %v1928, 2
    %v1930 = vadd.f32 %v1928, %v1929
    %v1931 = vrot.slane %v1930, 1
    %v1932 = vadd.f32 %v1930, %v1931
    %v1933 = vadd.f32 %v1907, %v1908
    %v1934 = vrot.slane %v1933, 4
    %v1935 = vadd.f32 %v1933, %v1934
    %v1936 = vrot.slane %v1935, 2
    %v1937 = vadd.f32 %v1935, %v1936
    %v1938 = vrot.slane %v1937, 1
    %v1939 = vadd.f32 %v1937, %v1938
    %v1940 = vadd.f32 %v1909, %v1910
    %v1941 = vrot.slane %v1940, 4
    %v1942 = vadd.f32 %v1940, %v1941
    %v1943 = vrot.slane %v1942, 2
    %v1944 = vadd.f32 %v1942, %v1943
    %v1945 = vrot.slane %v1944, 1
    %v1946 = vadd.f32 %v1944, %v1945
    %v1947 = vadd.f32 %v1911, %v1912
    %v1948 = vrot.slane %v1947, 4
    %v1949 = vadd.f32 %v1947, %v1948
    %v1950 = vrot.slane %v1949, 2
    %v1951 = vadd.f32 %v1949, %v1950
    %v1952 = vrot.slane %v1951, 1
    %v1953 = vadd.f32 %v1951, %v1952
    %v1954 = vadd.f32 %v1913, %v1914
    %v1955 = vrot.slane %v1954, 4
    %v1956 = vadd.f32 %v1954, %v1955
    %v1957 = vrot.slane %v1956, 2
    %v1958 = vadd.f32 %v1956, %v1957
    %v1959 = vrot.slane %v1958, 1
    %v1960 = vadd.f32 %v1958, %v1959
    %v1961 = vadd.f32 %v1915, %v1916
    %v1962 = vrot.slane %v1961, 4
    %v1963 = vadd.f32 %v1961, %v1962
    %v1964 = vrot.slane %v1963, 2
    %v1965 = vadd.f32 %v1963, %v1964
    %v1966 = vrot.slane %v1965, 1
    %v1967 = vadd.f32 %v1965, %v1966
    %v1968 = vadd.f32 %v1917, %v1918
    %v1969 = vrot.slane %v1968, 4
    %v1970 = vadd.f32 %v1968, %v1969
    %v1971 = vrot.slane %v1970, 2
    %v1972 = vadd.f32 %v1970, %v1971
    %v1973 = vrot.slane %v1972, 1
    %v1974 = vadd.f32 %v1972, %v1973
    %v1975 = vmul.f32 %v1925, 0.0625
    %v1976 = vmul.f32 %v1932, 0.0625
    %v1977 = vmul.f32 %v1939, 0.0625
    %v1978 = vmul.f32 %v1946, 0.0625
    %v1979 = vmul.f32 %v1953, 0.0625
    %v1980 = vmul.f32 %v1960, 0.0625
    %v1981 = vmul.f32 %v1967, 0.0625
    %v1982 = vmul.f32 %v1974, 0.0625
    %v1983 = vld [vmem:[%s7] sm:$0x1]
    %v1984 = vld [vmem:[#allocation2] sm:$0x1]
    %1986 = vset.pattern.permute.xlu0 0
    %1987 = vperm.xlu0 %1986, %v1984
    %v1988 = vpop.permute.xlu0 %1987
    %v1990 = vlaneseq
    %v1991 = vshrl.u32 %v1990, 7
    %v1992 = vsub.s32 0, %v1991
    %v1993 = vrot.slane %v1988, %v1992
    %vm2002 = vcmask 1041409
    %v2003 = vsel %vm2002, %v1976, %v1975
    %vm2004 = vcmask 1042434
    %v2005 = vsel %vm2004, %v1977, %v2003
    %vm2006 = vcmask 1043459
    %v2007 = vsel %vm2006, %v1978, %v2005
    %vm2008 = vcmask 1044484
    %v2009 = vsel %vm2008, %v1979, %v2007
    %vm2010 = vcmask 1045509
    %v2011 = vsel %vm2010, %v1980, %v2009
    %vm2012 = vcmask 1046534
    %v2013 = vsel %vm2012, %v1981, %v2011
    %vm2014 = vcmask 1047559
    %v2015 = vsel %vm2014, %v1982, %v2013
    %2017 = vmatprep.subr.mxu0 0.0
    %2018 = vmatpush1.xpose.msra.mxu0 %v2015
    %2019 = vmatprep.subr.mxu0 0.0
    %2020 = vmatpush1.xpose.msra.mxu0 0.0
    %2021 = vmatprep.subr.mxu0 0.0
    %2022 = vmatpush1.xpose.msra.mxu0 0.0
    %2023 = vmatprep.subr.mxu0 0.0
    %2024 = vmatpush1.xpose.msra.mxu0 0.0
    %2025 = vmatprep.subr.mxu0 0.0
    %2026 = vmatpush1.xpose.msra.mxu0 0.0
    %2027 = vmatprep.subr.mxu0 0.0
    %2028 = vmatpush1.xpose.msra.mxu0 0.0
    %2029 = vmatprep.subr.mxu0 0.0
    %2030 = vmatpush1.xpose.msra.mxu0 0.0
    %2031 = vmatprep.subr.mxu0 0.0
    %2032 = vmatpush1.xpose.msra.mxu0 0.0
    %2033 = vmatprep.subr.mxu0 0.0
    %2034 = vmatpush1.xpose.msra.mxu0 0.0
    %2035 = vmatprep.subr.mxu0 0.0
    %2036 = vmatpush1.xpose.msra.mxu0 0.0
    %2037 = vmatprep.subr.mxu0 0.0
    %2038 = vmatpush1.xpose.msra.mxu0 0.0
    %2039 = vmatprep.subr.mxu0 0.0
    %2040 = vmatpush1.xpose.msra.mxu0 0.0
    %2041 = vmatprep.subr.mxu0 0.0
    %2042 = vmatpush1.xpose.msra.mxu0 0.0
    %2043 = vmatprep.subr.mxu0 0.0
    %2044 = vmatpush1.xpose.msra.mxu0 0.0
    %2045 = vmatprep.subr.mxu0 0.0
    %2046 = vmatpush1.xpose.msra.mxu0 0.0
    %2047 = vmatprep.subr.mxu0 0.0
    %2048 = vmatpush1.xpose.msra.mxu0 0.0
    %2049 = vmatprep.subr.mxu0 0.0
    %2050 = vmatpush1.xpose.msra.mxu0 0.0
    %2051 = vmatprep.subr.mxu0 0.0
    %2052 = vmatpush1.xpose.msra.mxu0 0.0
    %2053 = vmatprep.subr.mxu0 0.0
    %2054 = vmatpush1.xpose.msra.mxu0 0.0
    %2055 = vmatprep.subr.mxu0 0.0
    %2056 = vmatpush1.xpose.msra.mxu0 0.0
    %2057 = vmatprep.subr.mxu0 0.0
    %2058 = vmatpush1.xpose.msra.mxu0 0.0
    %2059 = vmatprep.subr.mxu0 0.0
    %2060 = vmatpush1.xpose.msra.mxu0 0.0
    %2061 = vmatprep.subr.mxu0 0.0
    %2062 = vmatpush1.xpose.msra.mxu0 0.0
    %2063 = vmatprep.subr.mxu0 0.0
    %2064 = vmatpush1.xpose.msra.mxu0 0.0
    %2065 = vmatprep.subr.mxu0 0.0
    %2066 = vmatpush1.xpose.msra.mxu0 0.0
    %2067 = vmatprep.subr.mxu0 0.0
    %2068 = vmatpush1.xpose.msra.mxu0 0.0
    %2069 = vmatprep.subr.mxu0 0.0
    %2070 = vmatpush1.xpose.msra.mxu0 0.0
    %2071 = vmatprep.subr.mxu0 0.0
    %2072 = vmatpush1.xpose.msra.mxu0 0.0
    %2073 = vmatprep.subr.mxu0 0.0
    %2074 = vmatpush1.xpose.msra.mxu0 0.0
    %2075 = vmatprep.subr.mxu0 0.0
    %2076 = vmatpush1.xpose.msra.mxu0 0.0
    %2077 = vmatprep.subr.mxu0 0.0
    %2078 = vmatpush1.xpose.msra.mxu0 0.0
    %2079 = vmatprep.subr.mxu0 0.0
    %2080 = vmatpush1.xpose.msra.mxu0 0.0
    %2081 = vmatprep.mubr.f32.mxu0 0.0
    %2082 = vmatmul.mubr.f32.gmra.mrb[0].mxu0 %v1983
    %v2083 = vpop.f32.mrb[0].mxu0
    %v2084 = vadd.f32 %v1993, %v2083
    %v2085 = vpop.f32.mrb[0].mxu0
    %2086 = vdwg.mxu0
    %vm2087 = vcmask 57344
    %2088 = vst.msk [vmem:[#allocation3] sm:$0x1] %vm2087, %v2084
    // Predicated region
    $region38: #{conv1d_classifier_forward.1} parent=1 // pred_check
      _
    $region39: #{conv1d_classifier_forward.1} parent=1 // pred_check_branch
      %2090 = sbr.rel (0) target = $region41
    $region40: #{conv1d_classifier_forward.1} parent=1 // pred_region
      %s2092 = ssub.s32 16, 16
      %2093 = vsyncadd [#allocation4], %s2092
      %s2095 = sshll.u32 [#allocation3], 4
      %s2096 = int_to_ptr.vmem [resolvable:$true] %s2095
      %2098 = dma.vmem_to_hbm [thread:$0]  %s2096, 16, %s9, [#allocation4]
    $region41: #{conv1d_classifier_forward.1} parent=1 // pred_fallthru
      _
    // Predicated region
    $region42: #{conv1d_classifier_forward.1} parent=1 // pred_check
      _
    $region43: #{conv1d_classifier_forward.1} parent=1 // pred_check_branch
      %2100 = sbr.rel (0) target = $region45
    $region44: #{conv1d_classifier_forward.1} parent=1 // pred_region
      %2101 = dma.done [#allocation4], 16
    $region45: #{conv1d_classifier_forward.1} parent=1 // pred_fallthru
      _
    %2102 = vsyncpa [#allocation4], 1

</llo_original>
